<compile_context>
chip_gen: v7x
topology: tpu7x:2x2x1
jax: 0.10.0
libtpu: 0.0.40
codegen_flags: <defaults>
</compile_context>

<pallas_src>
import functools

import jax
import jax.numpy as jnp
from jax.experimental import pallas as pl
from jax.experimental.pallas import tpu as pltpu


def _corblock_z_kernel(x_ref, w_ref, b_ref, o_ref,
                       xpad_ref, patches_ref, acc_ref,
                       *, H, W, Cin, Cout, KS):
    """Fused conv(KSxKS, stride 1, 'same') + ReLU + maxpool(3x3, stride 2, pad 1).

    Refs (one image per grid step):
      x_ref       : (1, H, W, Cin)              unpadded NHWC image (compute dtype)
      w_ref       : (KS*KS*Cin, Cout)           conv weights, HWIO flattened over taps
      b_ref       : (1, 1, Cout)                conv bias (f32)
      o_ref       : (1, H//2, W//2, Cout)       pooled output (out dtype)
      xpad_ref    : VMEM (H+KS-1, W+KS-1, Cin)  in-kernel zero-halo staging
      patches_ref : VMEM (H*W, KS*KS*Cin)       im2col patch matrix
      acc_ref     : VMEM (H*W, Cout) f32        conv result / pooling staging
    """
    pad = KS // 2
    Hout, Wout = H // 2, W // 2
    HW = H * W

    # ---- in-kernel halo: zero the padded staging buffer, drop the image inside ----
    # (replaces the wrapper-side jnp.pad, which cost a full extra HBM pass)
    xpad_ref[...] = jnp.zeros_like(xpad_ref)
    xpad_ref[pad:pad + H, pad:pad + W, :] = x_ref[0]

    # ---- im2col: build the (HW, KS*KS*Cin) patch matrix ONCE (one shifted copy per
    # tap), then a single MXU matmul with f32 accumulation internal to the MXU. ----
    for kh in range(KS):
        for kw in range(KS):
            tap = kh * KS + kw
            patches_ref[:, tap * Cin:(tap + 1) * Cin] = (
                xpad_ref[kh:kh + H, kw:kw + W, :].reshape(HW, Cin))
    acc_ref[...] = jnp.dot(patches_ref[...], w_ref[...],
                           preferred_element_type=jnp.float32)

    # ---- maxpool 3x3 / stride 2 / pad 1 over the raw conv map ----
    # pool(relu(conv + b)) == relu(pool(conv) + b) since relu(. + b) is monotone, so
    # pool first (with -inf padding, like PyTorch) and do bias+ReLU on the 4x smaller
    # pooled map afterwards.
    #
    # W axis: rows of acc_ref are laid out flat as h*W + w and W is even, so a
    # stride-2 pick over the flat sublane axis enumerates exactly the even / odd
    # columns (2 strided reads instead of 9).
    ev = acc_ref[pl.ds(0, H * Wout, stride=2), :].reshape(H, Wout, Cout)   # cols 2c
    od = acc_ref[pl.ds(1, H * Wout, stride=2), :].reshape(H, Wout, Cout)   # cols 2c+1
    m_w = jnp.maximum(ev, od)
    prev_c = jnp.concatenate(                                              # cols 2c-1
        [jnp.full((H, 1, Cout), -jnp.inf, jnp.float32), od[:, :Wout - 1, :]], axis=1)
    m_w = jnp.maximum(m_w, prev_c)                                         # (H, Wout, C)

    # H axis is an outer (non-layout) dim: free reshape + slab stacking (pooled map is
    # already 2x smaller here, so the shift construction cost is negligible).
    m4 = m_w.reshape(Hout, 2, Wout, Cout)
    ev_r = m4[:, 0]                                                        # rows 2r
    od_r = m4[:, 1]                                                        # rows 2r+1
    m_h = jnp.maximum(ev_r, od_r)
    prev_r = jnp.concatenate(                                              # rows 2r-1
        [jnp.full((1, Wout, Cout), -jnp.inf, jnp.float32), od_r[:Hout - 1]], axis=0)
    pooled = jnp.maximum(m_h, prev_r)                                      # (Hout, Wout, C)

    # ---- bias + ReLU on the 4x smaller pooled map (f32 VPU math), cast on store ----
    o_ref[0] = jnp.maximum(pooled + b_ref[...], 0.0).astype(o_ref.dtype)


def corblock_z_forward(x_nchw, conv_w_oihw, conv_b, *, stride=1,
                       compute_dtype=jnp.float32, out_dtype=None):
    """CORblock_Z.forward: conv(k, stride, pad=k//2) -> ReLU -> MaxPool2d(3, 2, 1)."""
    if stride != 1:
        # TODO(synk): general conv stride (e.g. CORnet-Z V1's 7x7/s2) not implemented;
        # the module default stride=1 is what this kernel covers.
        raise NotImplementedError("only the default conv stride=1 is supported")
    if out_dtype is None:
        out_dtype = compute_dtype   # bf16 compute -> bf16 outputs (half output traffic)

    N, Cin, H, W = x_nchw.shape
    Cout, Cin_w, KH, KW = conv_w_oihw.shape
    assert Cin_w == Cin and KH == KW and KH % 2 == 1, "square odd kernels only"
    KS, pad = KH, KH // 2
    assert H % 2 == 0 and W % 2 == 0, "even spatial dims assumed for the 3x3/s2/p1 pool"
    Hout, Wout = H // 2, W // 2

    # NCHW (PyTorch) -> NHWC for the kernel; OIHW -> HWIO, taps flattened on rows.
    # TODO(synk): in a full CORnet stack keep activations NHWC end-to-end so this
    # boundary transpose (and the inverse on the way out) happens once per network,
    # not once per block.
    x_nhwc = jnp.transpose(x_nchw, (0, 2, 3, 1)).astype(compute_dtype)
    w2d = jnp.transpose(conv_w_oihw, (2, 3, 1, 0)).astype(compute_dtype)
    w2d = w2d.reshape(KS * KS * Cin, Cout)
    b3 = conv_b.astype(jnp.float32).reshape(1, 1, Cout)   # bias/elementwise stay f32

    kernel = functools.partial(_corblock_z_kernel, H=H, W=W, Cin=Cin, Cout=Cout, KS=KS)

    flops = 2 * N * H * W * KS * KS * Cin * Cout
    bytes_accessed = int(
        x_nhwc.size * x_nhwc.dtype.itemsize
        + w2d.size * w2d.dtype.itemsize
        + b3.size * 4
        + N * Hout * Wout * Cout * jnp.dtype(out_dtype).itemsize)

    # TODO(synk): at real CORnet sizes (224x224, C>=64) add a row-tile grid axis with a
    # KS-1 row halo (manual DMA) so the per-step footprint fits v7x's 64 MiB VMEM, raise
    # vmem_limit_bytes on v5e/v6e if keeping big blocks, and consider pl.Buffered(3) /
    # fp8 weights (v7x) once profiled.  Whole-image blocks are fine at this toy shape.
    out_nhwc = pl.pallas_call(
        kernel,
        out_shape=jax.ShapeDtypeStruct((N, Hout, Wout, Cout), out_dtype),
        grid=(N,),    # N>=2 keeps both v7x TensorCores busy via the parallel axis
        in_specs=[
            pl.BlockSpec((1, H, W, Cin), lambda n: (n, 0, 0, 0)),
            pl.BlockSpec((KS * KS * Cin, Cout), lambda n: (0, 0)),
            pl.BlockSpec((1, 1, Cout), lambda n: (0, 0, 0)),
        ],
        out_specs=pl.BlockSpec((1, Hout, Wout, Cout), lambda n: (n, 0, 0, 0)),
        scratch_shapes=[
            pltpu.VMEM((H + 2 * pad, W + 2 * pad, Cin), compute_dtype),   # halo staging
            pltpu.VMEM((H * W, KS * KS * Cin), compute_dtype),            # im2col
            pltpu.VMEM((H * W, Cout), jnp.float32),                       # conv result
        ],
        compiler_params=pltpu.CompilerParams(dimension_semantics=("parallel",)),
        cost_estimate=pl.CostEstimate(flops=flops, transcendentals=0,
                                      bytes_accessed=bytes_accessed),
    )(x_nhwc, w2d, b3)

    return jnp.transpose(out_nhwc, (0, 3, 1, 2))  # back to NCHW at the module boundary


def corblock_z_reference(x_nchw, conv_w_oihw, conv_b):
    """Pure-JAX reference of the PyTorch forward (NCHW in / NCHW out)."""
    k = conv_w_oihw.shape[-1]
    p = k // 2
    x = jnp.transpose(x_nchw, (0, 2, 3, 1)).astype(jnp.float32)
    w = jnp.transpose(conv_w_oihw, (2, 3, 1, 0)).astype(jnp.float32)
    y = jax.lax.conv_general_dilated(
        x, w, window_strides=(1, 1), padding=((p, p), (p, p)),
        dimension_numbers=("NHWC", "HWIO", "NHWC"))
    y = jnp.maximum(y + conv_b[None, None, None, :], 0.0)
    pooled = jax.lax.reduce_window(
        y, -jnp.inf, jax.lax.max,
        window_dimensions=(1, 3, 3, 1), window_strides=(1, 2, 2, 1),
        padding=((0, 0), (1, 1), (1, 1), (0, 0)))
    return jnp.transpose(pooled, (0, 3, 1, 2))


if __name__ == "__main__":
    key = jax.random.PRNGKey(0)
    kx, kw, kb = jax.random.split(key, 3)

    # CORblock_Z(in_channels=4, out_channels=8), input (N=2, C=4, H=16, W=16)
    N, Cin, Cout, H, W, KS = 2, 4, 8, 16, 16, 3
    x = jax.random.normal(kx, (N, Cin, H, W), dtype=jnp.float32)
    conv_w = 0.1 * jax.random.normal(kw, (Cout, Cin, KS, KS), dtype=jnp.float32)
    conv_b = 0.1 * jax.random.normal(kb, (Cout,), dtype=jnp.float32)

    ref = corblock_z_reference(x, conv_w, conv_b)

    # f32 im2col MXU path: must match the reference tightly.
    out = jax.block_until_ready(corblock_z_forward(x, conv_w, conv_b))
    assert out.shape == (N, Cout, H // 2, W // 2), out.shape
    max_err = float(jnp.max(jnp.abs(out - ref)))
    assert max_err < 1e-4, f"f32 path mismatch vs reference: max abs err = {max_err}"

    # bf16 activations/weights/outputs, f32 MXU accumulation: looser tolerance from
    # bf16 rounding of the inputs/outputs.
    out_bf16 = jax.block_until_ready(
        corblock_z_forward(x, conv_w, conv_b, compute_dtype=jnp.bfloat16))
    assert out_bf16.dtype == jnp.bfloat16
    max_err_bf16 = float(jnp.max(jnp.abs(out_bf16.astype(jnp.float32) - ref)))
    assert max_err_bf16 < 1e-1, f"bf16 path mismatch vs reference: {max_err_bf16}"

    print("KERNEL_OK")
</pallas_src>

<mosaic_0001>
module attributes {stable_mosaic.version = 11 : i64} {
  func.func @_corblock_z_kernel(%arg0: i32, %arg1: memref<1x16x16x4xf32, #tpu.memory_space<vmem>>, %arg2: memref<36x8xf32, #tpu.memory_space<vmem>>, %arg3: memref<1x1x8xf32, #tpu.memory_space<vmem>>, %arg4: memref<1x8x8x8xf32, #tpu.memory_space<vmem>>, %arg5: memref<18x18x4xf32, #tpu.memory_space<vmem>>, %arg6: memref<256x36xf32, #tpu.memory_space<vmem>>, %arg7: memref<256x8xf32, #tpu.memory_space<vmem>>) attributes {dimension_semantics = [#tpu.dimension_semantics<parallel>], iteration_bounds = array<i64: 2>, scalar_prefetch = 0 : i64, scratch_operands = 3 : i64, tpu.core_type = #tpu.core_type<tc>, window_params = [{transform_indices = @transform_0, window_bounds = array<i64: 1, 16, 16, 4>}, {pipeline_mode = #tpu.pipeline_mode<synchronous>, transform_indices = @transform_1, window_bounds = array<i64: 36, 8>}, {pipeline_mode = #tpu.pipeline_mode<synchronous>, transform_indices = @transform_2, window_bounds = array<i64: 1, 1, 8>}, {transform_indices = @transform_3, window_bounds = array<i64: 1, 8, 8, 8>}]} {
    %cst = arith.constant 0.000000e+00 : f32
    %0 = vector.broadcast %cst : f32 to vector<18x18x4xf32>
    %c0 = arith.constant 0 : index
    %c0_0 = arith.constant 0 : index
    %c0_1 = arith.constant 0 : index
    %1 = vector.load %arg5[%c0, %c0_0, %c0_1] : memref<18x18x4xf32, #tpu.memory_space<vmem>>, vector<18x18x4xf32>
    tpu.vector_store %arg5[%c0, %c0_0, %c0_1], %0 {strides = array<i32>} : memref<18x18x4xf32, #tpu.memory_space<vmem>>, vector<18x18x4xf32>,
    %c0_2 = arith.constant 0 : index
    %c0_3 = arith.constant 0 : index
    %c0_4 = arith.constant 0 : index
    %c0_5 = arith.constant 0 : index
    %2 = vector.load %arg1[%c0_2, %c0_3, %c0_4, %c0_5] : memref<1x16x16x4xf32, #tpu.memory_space<vmem>>, vector<1x16x16x4xf32>
    %3 = vector.shape_cast %2 : vector<1x16x16x4xf32> to vector<16x16x4xf32>
    %c1 = arith.constant 1 : index
    %c1_6 = arith.constant 1 : index
    %c0_7 = arith.constant 0 : index
    %4 = vector.load %arg5[%c1, %c1_6, %c0_7] : memref<18x18x4xf32, #tpu.memory_space<vmem>>, vector<16x16x4xf32>
    tpu.vector_store %arg5[%c1, %c1_6, %c0_7], %3 {strides = array<i32>} : memref<18x18x4xf32, #tpu.memory_space<vmem>>, vector<16x16x4xf32>,
    %c0_8 = arith.constant 0 : index
    %c0_9 = arith.constant 0 : index
    %c0_10 = arith.constant 0 : index
    %5 = vector.load %arg5[%c0_8, %c0_9, %c0_10] : memref<18x18x4xf32, #tpu.memory_space<vmem>>, vector<16x16x4xf32>
    %6 = vector.shape_cast %5 : vector<16x16x4xf32> to vector<256x4xf32>
    %c0_11 = arith.constant 0 : index
    %c0_12 = arith.constant 0 : index
    %7 = vector.load %arg6[%c0_11, %c0_12] : memref<256x36xf32, #tpu.memory_space<vmem>>, vector<256x4xf32>
    tpu.vector_store %arg6[%c0_11, %c0_12], %6 {strides = array<i32>} : memref<256x36xf32, #tpu.memory_space<vmem>>, vector<256x4xf32>,
    %c0_13 = arith.constant 0 : index
    %c1_14 = arith.constant 1 : index
    %c0_15 = arith.constant 0 : index
    %8 = vector.load %arg5[%c0_13, %c1_14, %c0_15] : memref<18x18x4xf32, #tpu.memory_space<vmem>>, vector<16x16x4xf32>
    %9 = vector.shape_cast %8 : vector<16x16x4xf32> to vector<256x4xf32>
    %c0_16 = arith.constant 0 : index
    %c4 = arith.constant 4 : index
    %10 = vector.load %arg6[%c0_16, %c4] : memref<256x36xf32, #tpu.memory_space<vmem>>, vector<256x4xf32>
    tpu.vector_store %arg6[%c0_16, %c4], %9 {strides = array<i32>} : memref<256x36xf32, #tpu.memory_space<vmem>>, vector<256x4xf32>,
    %c0_17 = arith.constant 0 : index
    %c2 = arith.constant 2 : index
    %c0_18 = arith.constant 0 : index
    %11 = vector.load %arg5[%c0_17, %c2, %c0_18] : memref<18x18x4xf32, #tpu.memory_space<vmem>>, vector<16x16x4xf32>
    %12 = vector.shape_cast %11 : vector<16x16x4xf32> to vector<256x4xf32>
    %c0_19 = arith.constant 0 : index
    %c8 = arith.constant 8 : index
    %13 = vector.load %arg6[%c0_19, %c8] : memref<256x36xf32, #tpu.memory_space<vmem>>, vector<256x4xf32>
    tpu.vector_store %arg6[%c0_19, %c8], %12 {strides = array<i32>} : memref<256x36xf32, #tpu.memory_space<vmem>>, vector<256x4xf32>,
    %c1_20 = arith.constant 1 : index
    %c0_21 = arith.constant 0 : index
    %c0_22 = arith.constant 0 : index
    %14 = vector.load %arg5[%c1_20, %c0_21, %c0_22] : memref<18x18x4xf32, #tpu.memory_space<vmem>>, vector<16x16x4xf32>
    %15 = vector.shape_cast %14 : vector<16x16x4xf32> to vector<256x4xf32>
    %c0_23 = arith.constant 0 : index
    %c12 = arith.constant 12 : index
    %16 = vector.load %arg6[%c0_23, %c12] : memref<256x36xf32, #tpu.memory_space<vmem>>, vector<256x4xf32>
    tpu.vector_store %arg6[%c0_23, %c12], %15 {strides = array<i32>} : memref<256x36xf32, #tpu.memory_space<vmem>>, vector<256x4xf32>,
    %c1_24 = arith.constant 1 : index
    %c1_25 = arith.constant 1 : index
    %c0_26 = arith.constant 0 : index
    %17 = vector.load %arg5[%c1_24, %c1_25, %c0_26] : memref<18x18x4xf32, #tpu.memory_space<vmem>>, vector<16x16x4xf32>
    %18 = vector.shape_cast %17 : vector<16x16x4xf32> to vector<256x4xf32>
    %c0_27 = arith.constant 0 : index
    %c16 = arith.constant 16 : index
    %19 = vector.load %arg6[%c0_27, %c16] : memref<256x36xf32, #tpu.memory_space<vmem>>, vector<256x4xf32>
    tpu.vector_store %arg6[%c0_27, %c16], %18 {strides = array<i32>} : memref<256x36xf32, #tpu.memory_space<vmem>>, vector<256x4xf32>,
    %c1_28 = arith.constant 1 : index
    %c2_29 = arith.constant 2 : index
    %c0_30 = arith.constant 0 : index
    %20 = vector.load %arg5[%c1_28, %c2_29, %c0_30] : memref<18x18x4xf32, #tpu.memory_space<vmem>>, vector<16x16x4xf32>
    %21 = vector.shape_cast %20 : vector<16x16x4xf32> to vector<256x4xf32>
    %c0_31 = arith.constant 0 : index
    %c20 = arith.constant 20 : index
    %22 = vector.load %arg6[%c0_31, %c20] : memref<256x36xf32, #tpu.memory_space<vmem>>, vector<256x4xf32>
    tpu.vector_store %arg6[%c0_31, %c20], %21 {strides = array<i32>} : memref<256x36xf32, #tpu.memory_space<vmem>>, vector<256x4xf32>,
    %c2_32 = arith.constant 2 : index
    %c0_33 = arith.constant 0 : index
    %c0_34 = arith.constant 0 : index
    %23 = vector.load %arg5[%c2_32, %c0_33, %c0_34] : memref<18x18x4xf32, #tpu.memory_space<vmem>>, vector<16x16x4xf32>
    %24 = vector.shape_cast %23 : vector<16x16x4xf32> to vector<256x4xf32>
    %c0_35 = arith.constant 0 : index
    %c24 = arith.constant 24 : index
    %25 = vector.load %arg6[%c0_35, %c24] : memref<256x36xf32, #tpu.memory_space<vmem>>, vector<256x4xf32>
    tpu.vector_store %arg6[%c0_35, %c24], %24 {strides = array<i32>} : memref<256x36xf32, #tpu.memory_space<vmem>>, vector<256x4xf32>,
    %c2_36 = arith.constant 2 : index
    %c1_37 = arith.constant 1 : index
    %c0_38 = arith.constant 0 : index
    %26 = vector.load %arg5[%c2_36, %c1_37, %c0_38] : memref<18x18x4xf32, #tpu.memory_space<vmem>>, vector<16x16x4xf32>
    %27 = vector.shape_cast %26 : vector<16x16x4xf32> to vector<256x4xf32>
    %c0_39 = arith.constant 0 : index
    %c28 = arith.constant 28 : index
    %28 = vector.load %arg6[%c0_39, %c28] : memref<256x36xf32, #tpu.memory_space<vmem>>, vector<256x4xf32>
    tpu.vector_store %arg6[%c0_39, %c28], %27 {strides = array<i32>} : memref<256x36xf32, #tpu.memory_space<vmem>>, vector<256x4xf32>,
    %c2_40 = arith.constant 2 : index
    %c2_41 = arith.constant 2 : index
    %c0_42 = arith.constant 0 : index
    %29 = vector.load %arg5[%c2_40, %c2_41, %c0_42] : memref<18x18x4xf32, #tpu.memory_space<vmem>>, vector<16x16x4xf32>
    %30 = vector.shape_cast %29 : vector<16x16x4xf32> to vector<256x4xf32>
    %c0_43 = arith.constant 0 : index
    %c32 = arith.constant 32 : index
    %31 = vector.load %arg6[%c0_43, %c32] : memref<256x36xf32, #tpu.memory_space<vmem>>, vector<256x4xf32>
    tpu.vector_store %arg6[%c0_43, %c32], %30 {strides = array<i32>} : memref<256x36xf32, #tpu.memory_space<vmem>>, vector<256x4xf32>,
    %c0_44 = arith.constant 0 : index
    %c0_45 = arith.constant 0 : index
    %32 = vector.load %arg6[%c0_44, %c0_45] : memref<256x36xf32, #tpu.memory_space<vmem>>, vector<256x36xf32>
    %c0_46 = arith.constant 0 : index
    %c0_47 = arith.constant 0 : index
    %33 = vector.load %arg2[%c0_46, %c0_47] : memref<36x8xf32, #tpu.memory_space<vmem>>, vector<36x8xf32>
    %cst_48 = arith.constant dense<0.000000e+00> : vector<256x8xf32>
    %34 = tpu.matmul %32, %33, %cst_48 {dimension_numbers = #tpu.dot_dimension_numbers<[1], [0], [0], [1], [0, 0, 1, 1], [], []>} : vector<256x36xf32>, vector<36x8xf32>, vector<256x8xf32> -> vector<256x8xf32>
    %c0_49 = arith.constant 0 : index
    %c0_50 = arith.constant 0 : index
    %35 = vector.load %arg7[%c0_49, %c0_50] : memref<256x8xf32, #tpu.memory_space<vmem>>, vector<256x8xf32>
    tpu.vector_store %arg7[%c0_49, %c0_50], %34 {strides = array<i32>} : memref<256x8xf32, #tpu.memory_space<vmem>>, vector<256x8xf32>,
    %c0_51 = arith.constant 0 : index
    %c0_52 = arith.constant 0 : index
    %36 = tpu.strided_load %arg7[%c0_51, %c0_52] {strides = array<i32: 2, 1>} : memref<256x8xf32, #tpu.memory_space<vmem>>, vector<128x8xf32>
    %37 = vector.shape_cast %36 : vector<128x8xf32> to vector<16x8x8xf32>
    %c1_53 = arith.constant 1 : index
    %c0_54 = arith.constant 0 : index
    %38 = tpu.strided_load %arg7[%c1_53, %c0_54] {strides = array<i32: 2, 1>} : memref<256x8xf32, #tpu.memory_space<vmem>>, vector<128x8xf32>
    %39 = vector.shape_cast %38 : vector<128x8xf32> to vector<16x8x8xf32>
    %40 = arith.maximumf %37, %39 : vector<16x8x8xf32>
    %cst_55 = arith.constant 0xFF800000 : f32
    %41 = vector.broadcast %cst_55 : f32 to vector<16x1x8xf32>
    %42 = vector.extract_strided_slice %39 {offsets = [0, 0, 0], sizes = [16, 7, 8], strides = [1, 1, 1]} : vector<16x8x8xf32> to vector<16x7x8xf32>
    %43 = tpu.concatenate %41, %42 in 1 : vector<16x1x8xf32>, vector<16x7x8xf32> -> vector<16x8x8xf32>
    %44 = arith.maximumf %40, %43 : vector<16x8x8xf32>
    %45 = vector.shape_cast %44 : vector<16x8x8xf32> to vector<8x2x8x8xf32>
    %46 = vector.extract_strided_slice %45 {offsets = [0, 0, 0, 0], sizes = [8, 1, 8, 8], strides = [1, 1, 1, 1]} : vector<8x2x8x8xf32> to vector<8x1x8x8xf32>
    %47 = vector.shape_cast %46 : vector<8x1x8x8xf32> to vector<8x8x8xf32>
    %48 = vector.extract_strided_slice %45 {offsets = [0, 1, 0, 0], sizes = [8, 1, 8, 8], strides = [1, 1, 1, 1]} : vector<8x2x8x8xf32> to vector<8x1x8x8xf32>
    %49 = vector.shape_cast %48 : vector<8x1x8x8xf32> to vector<8x8x8xf32>
    %50 = arith.maximumf %47, %49 : vector<8x8x8xf32>
    %cst_56 = arith.constant 0xFF800000 : f32
    %51 = vector.broadcast %cst_56 : f32 to vector<1x8x8xf32>
    %52 = vector.extract_strided_slice %49 {offsets = [0, 0, 0], sizes = [7, 8, 8], strides = [1, 1, 1]} : vector<8x8x8xf32> to vector<7x8x8xf32>
    %53 = tpu.concatenate %51, %52 in 0 : vector<1x8x8xf32>, vector<7x8x8xf32> -> vector<8x8x8xf32>
    %54 = arith.maximumf %50, %53 : vector<8x8x8xf32>
    %c0_57 = arith.constant 0 : index
    %c0_58 = arith.constant 0 : index
    %c0_59 = arith.constant 0 : index
    %55 = vector.load %arg3[%c0_57, %c0_58, %c0_59] : memref<1x1x8xf32, #tpu.memory_space<vmem>>, vector<1x1x8xf32>
    %56 = vector.broadcast %55 : vector<1x1x8xf32> to vector<8x8x8xf32>
    %57 = arith.addf %54, %56 : vector<8x8x8xf32>
    %cst_60 = arith.constant 0.000000e+00 : f32
    %58 = vector.broadcast %cst_60 : f32 to vector<8x8x8xf32>
    %59 = arith.maximumf %57, %58 : vector<8x8x8xf32>
    %c0_61 = arith.constant 0 : index
    %c0_62 = arith.constant 0 : index
    %c0_63 = arith.constant 0 : index
    %c0_64 = arith.constant 0 : index
    %60 = vector.load %arg4[%c0_61, %c0_62, %c0_63, %c0_64] : memref<1x8x8x8xf32, #tpu.memory_space<vmem>>, vector<1x8x8x8xf32>
    %61 = vector.shape_cast %60 : vector<1x8x8x8xf32> to vector<8x8x8xf32>
    %62 = vector.shape_cast %59 : vector<8x8x8xf32> to vector<1x8x8x8xf32>
    tpu.vector_store %arg4[%c0_61, %c0_62, %c0_63, %c0_64], %62 {strides = array<i32>} : memref<1x8x8x8xf32, #tpu.memory_space<vmem>>, vector<1x8x8x8xf32>,
    return
  }
  func.func @transform_0(%arg0: i32) -> (i32, i32, i32, i32) {
    %c0_i32 = arith.constant 0 : i32
    %c0_i32_0 = arith.constant 0 : i32
    %c0_i32_1 = arith.constant 0 : i32
    %c0_i32_2 = arith.constant 0 : i32
    return %arg0, %c0_i32, %c0_i32_0, %c0_i32_1 : i32, i32, i32, i32
  }
  func.func @transform_1(%arg0: i32) -> (i32, i32) {
    %c0_i32 = arith.constant 0 : i32
    %c0_i32_0 = arith.constant 0 : i32
    %c0_i32_1 = arith.constant 0 : i32
    return %c0_i32, %c0_i32_0 : i32, i32
  }
  func.func @transform_2(%arg0: i32) -> (i32, i32, i32) {
    %c0_i32 = arith.constant 0 : i32
    %c0_i32_0 = arith.constant 0 : i32
    %c0_i32_1 = arith.constant 0 : i32
    %c0_i32_2 = arith.constant 0 : i32
    return %c0_i32, %c0_i32_0, %c0_i32_1 : i32, i32, i32
  }
  func.func @transform_3(%arg0: i32) -> (i32, i32, i32, i32) {
    %c0_i32 = arith.constant 0 : i32
    %c0_i32_0 = arith.constant 0 : i32
    %c0_i32_1 = arith.constant 0 : i32
    %c0_i32_2 = arith.constant 0 : i32
    return %arg0, %c0_i32, %c0_i32_0, %c0_i32_1 : i32, i32, i32, i32
  }
}

</mosaic_0001>

<llo_original>
// kernel: tpu_custom_call.1
$region0: #{tpu_custom_call.1}
  #allocation0 [shape = 'u32[]', space=smem, size = 0x4, offset = 0x4, fixed_abs, tag = 'smem constant byte address 0x4 - core index']
  #allocation1 [shape = 'u32[144,128]{1,0:T(1,128)}', space=vmem, size = 0x12000, scoped, tag = 'internal scratch']
  #allocation2 [shape = 'f32[18,18,4]{2,1,0:T(8,128)}', space=vmem, size = 0x36000, scoped, tag = 'scratch operand']
  #allocation3 [shape = 'f32[256,36]{1,0:T(8,128)}', space=vmem, size = 0x20000, scoped, tag = 'scratch operand']
  #allocation4 [shape = 'f32[256,8]{1,0:T(8,128)}', space=vmem, size = 0x20000, scoped, tag = 'scratch operand']
  %s0 = inlined_call_operand.vmem [shape: f32[2,16,16,4], index: 0, kind: input, shape index: {}]
  %s1 = inlined_call_operand.vmem [shape: f32[36,8], index: 1, kind: input, shape index: {}]
  %s2 = inlined_call_operand.vmem [shape: f32[1,1,8], index: 2, kind: input, shape index: {}]
  %s3 = inlined_call_operand.hbm [shape: f32[2,8,8,8], index: 3, kind: output, shape index: {}]
  %s4 = sld [smem:[#allocation0]]
  $region45: #{tpu_custom_call.1} parent=0
    _
  %s6 = ssub.s32 1, %s4
  %s7 = scalar_select 0, %s6, %s4
  $region1: #{tpu_custom_call.1} parent=0
    #allocation5 [shape = 'u8[65536]{0}', space=vmem, size = 0x10000, scoped, tag = 'output window, operand 0']
    #allocation6 [shape = 's32[2]{0}', space=sflag, size = 0x8, scoped, tag = 'scoped memory for tpu_custom_call.1']
    %8 = vsyncpa [#allocation6], 0
    %s9 = scalar_lea.sflag [#allocation6], 1
    %10 = vsyncpa %s9, 0
    loop: start=0, step=1, limit=4
    $region2: #{tpu_custom_call.1} parent=1 // loop_pre_header
      _
    $region3: #{tpu_custom_call.1} parent=1 // loop_header
      %s12 = sphi 0, %s16
      %p13 = scmp.ge.s32.totalorder %s12, 4
      %s22 = sphi 0, %s24
      %s25 = sphi 0, %s22
      %s26 = sphi 0, %s25
      %s42 = sphi 0, %s26
      %s46 = sphi 0, %s46
      %s48 = sphi 0, %s46
      %s49 = sphi 0, %s48
      %s63 = sphi 0, %s49
      %s67 = sphi 0, %s67
      %s69 = sphi 0, %s67
      %s70 = sphi 0, %s69
      %s84 = sphi 0, %s70
      %s90 = sphi 0, %s92
      %s93 = sphi 0, %s90
      %s94 = sphi 0, %s93
      %s110 = sphi 0, %s94
    $region4: #{tpu_custom_call.1} parent=1 // loop_header_branch
      %15 = sbr.rel (%p13) target = $region8
    $region5: #{tpu_custom_call.1} parent=1 // loop_body
      %s17 = ssub.s32 %s12, 1
      %s18 = ssub.s32 %s12, 2
      %s19 = sadd.s32 %s12, 1
      %s20 = ssub.s32 %s12, %s19
      %p21 = scmp.eq.s32.totalorder %s20, 0
      %s23 = sadd.s32 %s22, 1
      %s24 = scalar_select %p21, %s22, %s23
      %p27 = pneg %p21
      %p28 = scmp.eq.s32.totalorder %s12, 1
      %p29 = por %p27, %p28
      %p30 = scmp.ne.s32.totalorder %s22, %s25
      %p31 = scmp.eq.s32.totalorder %s12, 0
      %p32 = por %p30, %p31
      %p33 = scmp.ne.s32.totalorder %s22, %s25
      %p34 = scmp.eq.s32.totalorder %s17, 1
      %p35 = por %p33, %p34
      %p36 = scmp.ne.s32.totalorder %s25, %s26
      %p37 = scmp.eq.s32.totalorder %s17, 0
      %p38 = por %p36, %p37
      %p39 = scmp.ne.s32.totalorder %s25, %s26
      %p40 = scmp.eq.s32.totalorder %s18, 1
      %p41 = por %p39, %p40
      %p43 = scmp.ne.s32.totalorder %s26, %s42
      %p44 = scmp.eq.s32.totalorder %s18, 0
      %p45 = por %p43, %p44
      %s47 = sadd.s32 %s46, 1
      %p50 = scmp.eq.s32.totalorder %s12, 1
      %p51 = scmp.ne.s32.totalorder %s46, %s48
      %p52 = scmp.eq.s32.totalorder %s12, 0
      %p53 = por %p51, %p52
      %p54 = scmp.ne.s32.totalorder %s46, %s48
      %p55 = scmp.eq.s32.totalorder %s17, 1
      %p56 = por %p54, %p55
      %p57 = scmp.ne.s32.totalorder %s48, %s49
      %p58 = scmp.eq.s32.totalorder %s17, 0
      %p59 = por %p57, %p58
      %p60 = scmp.ne.s32.totalorder %s48, %s49
      %p61 = scmp.eq.s32.totalorder %s18, 1
      %p62 = por %p60, %p61
      %p64 = scmp.ne.s32.totalorder %s49, %s63
      %p65 = scmp.eq.s32.totalorder %s18, 0
      %p66 = por %p64, %p65
      %s68 = sadd.s32 %s67, 1
      %p71 = scmp.eq.s32.totalorder %s12, 1
      %p72 = scmp.ne.s32.totalorder %s67, %s69
      %p73 = scmp.eq.s32.totalorder %s12, 0
      %p74 = por %p72, %p73
      %p75 = scmp.ne.s32.totalorder %s67, %s69
      %p76 = scmp.eq.s32.totalorder %s17, 1
      %p77 = por %p75, %p76
      %p78 = scmp.ne.s32.totalorder %s69, %s70
      %p79 = scmp.eq.s32.totalorder %s17, 0
      %p80 = por %p78, %p79
      %p81 = scmp.ne.s32.totalorder %s69, %s70
      %p82 = scmp.eq.s32.totalorder %s18, 1
      %p83 = por %p81, %p82
      %p85 = scmp.ne.s32.totalorder %s70, %s84
      %p86 = scmp.eq.s32.totalorder %s18, 0
      %p87 = por %p85, %p86
      %s88 = ssub.s32 %s12, %s19
      %p89 = scmp.eq.s32.totalorder %s88, 0
      %s91 = sadd.s32 %s90, 1
      %s92 = scalar_select %p89, %s90, %s91
      %p95 = pneg %p89
      %p96 = scmp.eq.s32.totalorder %s12, 1
      %p97 = por %p95, %p96
      %p98 = scmp.ne.s32.totalorder %s90, %s93
      %p99 = scmp.eq.s32.totalorder %s12, 0
      %p100 = por %p98, %p99
      %p101 = scmp.ne.s32.totalorder %s90, %s93
      %p102 = scmp.eq.s32.totalorder %s17, 1
      %p103 = por %p101, %p102
      %p104 = scmp.ne.s32.totalorder %s93, %s94
      %p105 = scmp.eq.s32.totalorder %s17, 0
      %p106 = por %p104, %p105
      %p107 = scmp.ne.s32.totalorder %s93, %s94
      %p108 = scmp.eq.s32.totalorder %s18, 1
      %p109 = por %p107, %p108
      %p111 = scmp.ne.s32.totalorder %s94, %s110
      %p112 = scmp.eq.s32.totalorder %s18, 0
      %p113 = por %p111, %p112
      %p114 = scmp.le.s32.totalorder 1, %s12
      %p115 = scmp.lt.s32.totalorder %s12, 3
      %p116 = pnand %p114, %p115
      %p117 = pneg %p116
      // Predicated region
      $region9: #{tpu_custom_call.1} parent=5 // pred_check
        _
      $region10: #{tpu_custom_call.1} parent=5 // pred_check_branch
        %119 = sbr.rel (%p116) target = $region12
      $region11: #{tpu_custom_call.1} parent=5 // pred_region
        %s120 = ssub.s32 %s12, 1
        // Predicated region
        $region13: #{tpu_custom_call.1} parent=11 // pred_check
          %p121 = pneg %p59
        $region14: #{tpu_custom_call.1} parent=11 // pred_check_branch
          %123 = sbr.rel (%p121) target = $region16
        $region15: #{tpu_custom_call.1} parent=11 // pred_region
          _
        $region16: #{tpu_custom_call.1} parent=11 // pred_fallthru
          _
        // Predicated region
        $region17: #{tpu_custom_call.1} parent=11 // pred_check
          %p124 = pneg %p80
        $region18: #{tpu_custom_call.1} parent=11 // pred_check_branch
          %126 = sbr.rel (%p124) target = $region20
        $region19: #{tpu_custom_call.1} parent=11 // pred_region
          _
        $region20: #{tpu_custom_call.1} parent=11 // pred_fallthru
          _
      $region12: #{tpu_custom_call.1} parent=5 // pred_fallthru
        _
      %p127 = scmp.lt.s32.totalorder %s12, 2
      // Predicated region
      $region21: #{tpu_custom_call.1} parent=5 // pred_check
        %p128 = pneg %p127
      $region22: #{tpu_custom_call.1} parent=5 // pred_check_branch
        %130 = sbr.rel (%p128) target = $region24
      $region23: #{tpu_custom_call.1} parent=5 // pred_region
        // Predicated region
        $region25: #{tpu_custom_call.1} parent=23 // pred_check
          %p131 = pneg %p32
        $region26: #{tpu_custom_call.1} parent=23 // pred_check_branch
          %133 = sbr.rel (%p131) target = $region28
        $region27: #{tpu_custom_call.1} parent=23 // pred_region
          %p134 = scmp.lt.s32.totalorder %s12, 1
          %s135 = scalar_select %p134, %s12, 1
          %s136 = smul.addr %s135, 32
          %s137 = smul.addr %s136, 8
          %s138 = scalar_lea.vmem %s0, %s137
        $region28: #{tpu_custom_call.1} parent=23 // pred_fallthru
          _
      $region24: #{tpu_custom_call.1} parent=5 // pred_fallthru
        _
      %p139 = scmp.le.s32.totalorder 1, %s12
      %p140 = scmp.lt.s32.totalorder %s12, 3
      %p141 = pnand %p139, %p140
      %p142 = pneg %p141
      // Predicated region
      $region29: #{tpu_custom_call.1} parent=5 // pred_check
        _
      $region30: #{tpu_custom_call.1} parent=5 // pred_check_branch
        %144 = sbr.rel (%p141) target = $region32
      $region31: #{tpu_custom_call.1} parent=5 // pred_region
        %s145 = ssub.s32 %s12, 1
        %p146 = scmp.lt.s32.totalorder %s17, 1
        %s147 = scalar_select %p146, %s17, 1
        %s148 = smul.addr %s147, 32
        %s149 = smul.addr %s148, 8
        %s150 = scalar_lea.vmem %s0, %s149
        %p151 = pneg %p38
        %p152 = pneg %p35
        %p153 = pneg %p59
        %p154 = pneg %p56
        %p155 = pneg %p80
        %p156 = pneg %p77
        %p157 = pneg %p106
        %p158 = pneg %p103
        %s159 = sand.u32 %s93, 1
        %s160 = scalar_lea.sflag [#allocation6], %s159
        %s161 = sand.u32 %s93, 1
        %s162 = smul.addr %s161, 64
        %s163 = scalar_lea.vmem [#allocation5], %s162
        %p164 = scmp.lt.s32.totalorder %s17, 1
        %s165 = scalar_select %p164, %s17, 1
        %s166 = smul.addr %s165, 32
        %s167 = smul.addr %s166, 8
        %s168 = scalar_lea.vmem %s0, %s167
        %vm169 = vcmask 31744
        %170 = vst.msk [vmem:[#allocation2] sm:$0xff] %vm169, 0.0
        %171 = vst.msk [vmem:[#allocation2 + $0x8] sm:$0xff] %vm169, 0.0
        %vm172 = vcmask 25600
        %173 = vst.msk [vmem:[#allocation2 + $0x10] sm:$0x3] %vm172, 0.0
        %174 = vst.msk [vmem:[#allocation2 + $0x18] sm:$0xff] %vm169, 0.0
        %175 = vst.msk [vmem:[#allocation2 + $0x20] sm:$0xff] %vm169, 0.0
        %176 = vst.msk [vmem:[#allocation2 + $0x28] sm:$0x3] %vm172, 0.0
        %177 = vst.msk [vmem:[#allocation2 + $0x30] sm:$0xff] %vm169, 0.0
        %178 = vst.msk [vmem:[#allocation2 + $0x38] sm:$0xff] %vm169, 0.0
        %179 = vst.msk [vmem:[#allocation2 + $0x40] sm:$0x3] %vm172, 0.0
        %180 = vst.msk [vmem:[#allocation2 + $0x48] sm:$0xff] %vm169, 0.0
        %181 = vst.msk [vmem:[#allocation2 + $0x50] sm:$0xff] %vm169, 0.0
        %182 = vst.msk [vmem:[#allocation2 + $0x58] sm:$0x3] %vm172, 0.0
        %183 = vst.msk [vmem:[#allocation2 + $0x60] sm:$0xff] %vm169, 0.0
        %184 = vst.msk [vmem:[#allocation2 + $0x68] sm:$0xff] %vm169, 0.0
        %185 = vst.msk [vmem:[#allocation2 + $0x70] sm:$0x3] %vm172, 0.0
        %186 = vst.msk [vmem:[#allocation2 + $0x78] sm:$0xff] %vm169, 0.0
        %187 = vst.msk [vmem:[#allocation2 + $0x80] sm:$0xff] %vm169, 0.0
        %188 = vst.msk [vmem:[#allocation2 + $0x88] sm:$0x3] %vm172, 0.0
        %189 = vst.msk [vmem:[#allocation2 + $0x90] sm:$0xff] %vm169, 0.0
        %190 = vst.msk [vmem:[#allocation2 + $0x98] sm:$0xff] %vm169, 0.0
        %191 = vst.msk [vmem:[#allocation2 + $0xa0] sm:$0x3] %vm172, 0.0
        %192 = vst.msk [vmem:[#allocation2 + $0xa8] sm:$0xff] %vm169, 0.0
        %193 = vst.msk [vmem:[#allocation2 + $0xb0] sm:$0xff] %vm169, 0.0
        %194 = vst.msk [vmem:[#allocation2 + $0xb8] sm:$0x3] %vm172, 0.0
        %195 = vst.msk [vmem:[#allocation2 + $0xc0] sm:$0xff] %vm169, 0.0
        %196 = vst.msk [vmem:[#allocation2 + $0xc8] sm:$0xff] %vm169, 0.0
        %197 = vst.msk [vmem:[#allocation2 + $0xd0] sm:$0x3] %vm172, 0.0
        %198 = vst.msk [vmem:[#allocation2 + $0xd8] sm:$0xff] %vm169, 0.0
        %199 = vst.msk [vmem:[#allocation2 + $0xe0] sm:$0xff] %vm169, 0.0
        %200 = vst.msk [vmem:[#allocation2 + $0xe8] sm:$0x3] %vm172, 0.0
        %201 = vst.msk [vmem:[#allocation2 + $0xf0] sm:$0xff] %vm169, 0.0
        %202 = vst.msk [vmem:[#allocation2 + $0xf8] sm:$0xff] %vm169, 0.0
        %203 = vst.msk [vmem:[#allocation2 + $0x100] sm:$0x3] %vm172, 0.0
        %204 = vst.msk [vmem:[#allocation2 + $0x108] sm:$0xff] %vm169, 0.0
        %205 = vst.msk [vmem:[#allocation2 + $0x110] sm:$0xff] %vm169, 0.0
        %206 = vst.msk [vmem:[#allocation2 + $0x118] sm:$0x3] %vm172, 0.0
        %207 = vst.msk [vmem:[#allocation2 + $0x120] sm:$0xff] %vm169, 0.0
        %208 = vst.msk [vmem:[#allocation2 + $0x128] sm:$0xff] %vm169, 0.0
        %209 = vst.msk [vmem:[#allocation2 + $0x130] sm:$0x3] %vm172, 0.0
        %210 = vst.msk [vmem:[#allocation2 + $0x138] sm:$0xff] %vm169, 0.0
        %211 = vst.msk [vmem:[#allocation2 + $0x140] sm:$0xff] %vm169, 0.0
        %212 = vst.msk [vmem:[#allocation2 + $0x148] sm:$0x3] %vm172, 0.0
        %213 = vst.msk [vmem:[#allocation2 + $0x150] sm:$0xff] %vm169, 0.0
        %214 = vst.msk [vmem:[#allocation2 + $0x158] sm:$0xff] %vm169, 0.0
        %215 = vst.msk [vmem:[#allocation2 + $0x160] sm:$0x3] %vm172, 0.0
        %216 = vst.msk [vmem:[#allocation2 + $0x168] sm:$0xff] %vm169, 0.0
        %217 = vst.msk [vmem:[#allocation2 + $0x170] sm:$0xff] %vm169, 0.0
        %218 = vst.msk [vmem:[#allocation2 + $0x178] sm:$0x3] %vm172, 0.0
        %219 = vst.msk [vmem:[#allocation2 + $0x180] sm:$0xff] %vm169, 0.0
        %220 = vst.msk [vmem:[#allocation2 + $0x188] sm:$0xff] %vm169, 0.0
        %221 = vst.msk [vmem:[#allocation2 + $0x190] sm:$0x3] %vm172, 0.0
        %222 = vst.msk [vmem:[#allocation2 + $0x198] sm:$0xff] %vm169, 0.0
        %223 = vst.msk [vmem:[#allocation2 + $0x1a0] sm:$0xff] %vm169, 0.0
        %224 = vst.msk [vmem:[#allocation2 + $0x1a8] sm:$0x3] %vm172, 0.0
        %v225 = vld [vmem:[%s168] sm:$0xff]
        %v226 = vld [vmem:[%s168 + $0x8] sm:$0xff]
        %v227 = vld [vmem:[%s168 + $0x10] sm:$0xff]
        %v228 = vld [vmem:[%s168 + $0x18] sm:$0xff]
        %v229 = vld [vmem:[%s168 + $0x20] sm:$0xff]
        %v230 = vld [vmem:[%s168 + $0x28] sm:$0xff]
        %v231 = vld [vmem:[%s168 + $0x30] sm:$0xff]
        %v232 = vld [vmem:[%s168 + $0x38] sm:$0xff]
        %v233 = vld [vmem:[%s168 + $0x40] sm:$0xff]
        %v234 = vld [vmem:[%s168 + $0x48] sm:$0xff]
        %v235 = vld [vmem:[%s168 + $0x50] sm:$0xff]
        %v236 = vld [vmem:[%s168 + $0x58] sm:$0xff]
        %v237 = vld [vmem:[%s168 + $0x60] sm:$0xff]
        %v238 = vld [vmem:[%s168 + $0x68] sm:$0xff]
        %v239 = vld [vmem:[%s168 + $0x70] sm:$0xff]
        %v240 = vld [vmem:[%s168 + $0x78] sm:$0xff]
        %v241 = vld [vmem:[%s168 + $0x80] sm:$0xff]
        %v242 = vld [vmem:[%s168 + $0x88] sm:$0xff]
        %v243 = vld [vmem:[%s168 + $0x90] sm:$0xff]
        %v244 = vld [vmem:[%s168 + $0x98] sm:$0xff]
        %v245 = vld [vmem:[%s168 + $0xa0] sm:$0xff]
        %v246 = vld [vmem:[%s168 + $0xa8] sm:$0xff]
        %v247 = vld [vmem:[%s168 + $0xb0] sm:$0xff]
        %v248 = vld [vmem:[%s168 + $0xb8] sm:$0xff]
        %v249 = vld [vmem:[%s168 + $0xc0] sm:$0xff]
        %v250 = vld [vmem:[%s168 + $0xc8] sm:$0xff]
        %v251 = vld [vmem:[%s168 + $0xd0] sm:$0xff]
        %v252 = vld [vmem:[%s168 + $0xd8] sm:$0xff]
        %v253 = vld [vmem:[%s168 + $0xe0] sm:$0xff]
        %v254 = vld [vmem:[%s168 + $0xe8] sm:$0xff]
        %v255 = vld [vmem:[%s168 + $0xf0] sm:$0xff]
        %v256 = vld [vmem:[%s168 + $0xf8] sm:$0xff]
        %s257 = scalar_lea.vmem [#allocation2], 24
        %258 = vst.msk [vmem:[%s257 + $0x1] sm:$0xff] %vm169, %v225
        %259 = vst.msk [vmem:[%s257 + $0x9] sm:$0xff] %vm169, %v226
        %260 = vst.msk [vmem:[%s257 + $0x19] sm:$0xff] %vm169, %v227
        %261 = vst.msk [vmem:[%s257 + $0x21] sm:$0xff] %vm169, %v228
        %262 = vst.msk [vmem:[%s257 + $0x31] sm:$0xff] %vm169, %v229
        %263 = vst.msk [vmem:[%s257 + $0x39] sm:$0xff] %vm169, %v230
        %264 = vst.msk [vmem:[%s257 + $0x49] sm:$0xff] %vm169, %v231
        %265 = vst.msk [vmem:[%s257 + $0x51] sm:$0xff] %vm169, %v232
        %266 = vst.msk [vmem:[%s257 + $0x61] sm:$0xff] %vm169, %v233
        %267 = vst.msk [vmem:[%s257 + $0x69] sm:$0xff] %vm169, %v234
        %268 = vst.msk [vmem:[%s257 + $0x79] sm:$0xff] %vm169, %v235
        %269 = vst.msk [vmem:[%s257 + $0x81] sm:$0xff] %vm169, %v236
        %270 = vst.msk [vmem:[%s257 + $0x91] sm:$0xff] %vm169, %v237
        %271 = vst.msk [vmem:[%s257 + $0x99] sm:$0xff] %vm169, %v238
        %272 = vst.msk [vmem:[%s257 + $0xa9] sm:$0xff] %vm169, %v239
        %273 = vst.msk [vmem:[%s257 + $0xb1] sm:$0xff] %vm169, %v240
        %274 = vst.msk [vmem:[%s257 + $0xc1] sm:$0xff] %vm169, %v241
        %275 = vst.msk [vmem:[%s257 + $0xc9] sm:$0xff] %vm169, %v242
        %276 = vst.msk [vmem:[%s257 + $0xd9] sm:$0xff] %vm169, %v243
        %277 = vst.msk [vmem:[%s257 + $0xe1] sm:$0xff] %vm169, %v244
        %278 = vst.msk [vmem:[%s257 + $0xf1] sm:$0xff] %vm169, %v245
        %279 = vst.msk [vmem:[%s257 + $0xf9] sm:$0xff] %vm169, %v246
        %280 = vst.msk [vmem:[%s257 + $0x109] sm:$0xff] %vm169, %v247
        %281 = vst.msk [vmem:[%s257 + $0x111] sm:$0xff] %vm169, %v248
        %282 = vst.msk [vmem:[%s257 + $0x121] sm:$0xff] %vm169, %v249
        %283 = vst.msk [vmem:[%s257 + $0x129] sm:$0xff] %vm169, %v250
        %284 = vst.msk [vmem:[%s257 + $0x139] sm:$0xff] %vm169, %v251
        %285 = vst.msk [vmem:[%s257 + $0x141] sm:$0xff] %vm169, %v252
        %286 = vst.msk [vmem:[%s257 + $0x151] sm:$0xff] %vm169, %v253
        %287 = vst.msk [vmem:[%s257 + $0x159] sm:$0xff] %vm169, %v254
        %288 = vst.msk [vmem:[%s257 + $0x169] sm:$0xff] %vm169, %v255
        %289 = vst.msk [vmem:[%s257 + $0x171] sm:$0xff] %vm169, %v256
        %v290 = vld [vmem:[#allocation2] sm:$0xff]
        %v291 = vld [vmem:[#allocation2 + $0x8] sm:$0xff]
        %v292 = vld [vmem:[#allocation2 + $0x18] sm:$0xff]
        %v293 = vld [vmem:[#allocation2 + $0x20] sm:$0xff]
        %v294 = vld [vmem:[#allocation2 + $0x30] sm:$0xff]
        %v295 = vld [vmem:[#allocation2 + $0x38] sm:$0xff]
        %v296 = vld [vmem:[#allocation2 + $0x48] sm:$0xff]
        %v297 = vld [vmem:[#allocation2 + $0x50] sm:$0xff]
        %v298 = vld [vmem:[#allocation2 + $0x60] sm:$0xff]
        %v299 = vld [vmem:[#allocation2 + $0x68] sm:$0xff]
        %v300 = vld [vmem:[#allocation2 + $0x78] sm:$0xff]
        %v301 = vld [vmem:[#allocation2 + $0x80] sm:$0xff]
        %v302 = vld [vmem:[#allocation2 + $0x90] sm:$0xff]
        %v303 = vld [vmem:[#allocation2 + $0x98] sm:$0xff]
        %v304 = vld [vmem:[#allocation2 + $0xa8] sm:$0xff]
        %v305 = vld [vmem:[#allocation2 + $0xb0] sm:$0xff]
        %v306 = vld [vmem:[#allocation2 + $0xc0] sm:$0xff]
        %v307 = vld [vmem:[#allocation2 + $0xc8] sm:$0xff]
        %v308 = vld [vmem:[#allocation2 + $0xd8] sm:$0xff]
        %v309 = vld [vmem:[#allocation2 + $0xe0] sm:$0xff]
        %v310 = vld [vmem:[#allocation2 + $0xf0] sm:$0xff]
        %v311 = vld [vmem:[#allocation2 + $0xf8] sm:$0xff]
        %v312 = vld [vmem:[#allocation2 + $0x108] sm:$0xff]
        %v313 = vld [vmem:[#allocation2 + $0x110] sm:$0xff]
        %v314 = vld [vmem:[#allocation2 + $0x120] sm:$0xff]
        %v315 = vld [vmem:[#allocation2 + $0x128] sm:$0xff]
        %v316 = vld [vmem:[#allocation2 + $0x138] sm:$0xff]
        %v317 = vld [vmem:[#allocation2 + $0x140] sm:$0xff]
        %v318 = vld [vmem:[#allocation2 + $0x150] sm:$0xff]
        %v319 = vld [vmem:[#allocation2 + $0x158] sm:$0xff]
        %v320 = vld [vmem:[#allocation2 + $0x168] sm:$0xff]
        %v321 = vld [vmem:[#allocation2 + $0x170] sm:$0xff]
        %322 = vst.msk [vmem:[#allocation3] sm:$0xff] %vm169, %v290
        %323 = vst.msk [vmem:[#allocation3 + $0x8] sm:$0xff] %vm169, %v291
        %324 = vst.msk [vmem:[#allocation3 + $0x10] sm:$0xff] %vm169, %v292
        %325 = vst.msk [vmem:[#allocation3 + $0x18] sm:$0xff] %vm169, %v293
        %326 = vst.msk [vmem:[#allocation3 + $0x20] sm:$0xff] %vm169, %v294
        %327 = vst.msk [vmem:[#allocation3 + $0x28] sm:$0xff] %vm169, %v295
        %328 = vst.msk [vmem:[#allocation3 + $0x30] sm:$0xff] %vm169, %v296
        %329 = vst.msk [vmem:[#allocation3 + $0x38] sm:$0xff] %vm169, %v297
        %330 = vst.msk [vmem:[#allocation3 + $0x40] sm:$0xff] %vm169, %v298
        %331 = vst.msk [vmem:[#allocation3 + $0x48] sm:$0xff] %vm169, %v299
        %332 = vst.msk [vmem:[#allocation3 + $0x50] sm:$0xff] %vm169, %v300
        %333 = vst.msk [vmem:[#allocation3 + $0x58] sm:$0xff] %vm169, %v301
        %334 = vst.msk [vmem:[#allocation3 + $0x60] sm:$0xff] %vm169, %v302
        %335 = vst.msk [vmem:[#allocation3 + $0x68] sm:$0xff] %vm169, %v303
        %336 = vst.msk [vmem:[#allocation3 + $0x70] sm:$0xff] %vm169, %v304
        %337 = vst.msk [vmem:[#allocation3 + $0x78] sm:$0xff] %vm169, %v305
        %338 = vst.msk [vmem:[#allocation3 + $0x80] sm:$0xff] %vm169, %v306
        %339 = vst.msk [vmem:[#allocation3 + $0x88] sm:$0xff] %vm169, %v307
        %340 = vst.msk [vmem:[#allocation3 + $0x90] sm:$0xff] %vm169, %v308
        %341 = vst.msk [vmem:[#allocation3 + $0x98] sm:$0xff] %vm169, %v309
        %342 = vst.msk [vmem:[#allocation3 + $0xa0] sm:$0xff] %vm169, %v310
        %343 = vst.msk [vmem:[#allocation3 + $0xa8] sm:$0xff] %vm169, %v311
        %344 = vst.msk [vmem:[#allocation3 + $0xb0] sm:$0xff] %vm169, %v312
        %345 = vst.msk [vmem:[#allocation3 + $0xb8] sm:$0xff] %vm169, %v313
        %346 = vst.msk [vmem:[#allocation3 + $0xc0] sm:$0xff] %vm169, %v314
        %347 = vst.msk [vmem:[#allocation3 + $0xc8] sm:$0xff] %vm169, %v315
        %348 = vst.msk [vmem:[#allocation3 + $0xd0] sm:$0xff] %vm169, %v316
        %349 = vst.msk [vmem:[#allocation3 + $0xd8] sm:$0xff] %vm169, %v317
        %350 = vst.msk [vmem:[#allocation3 + $0xe0] sm:$0xff] %vm169, %v318
        %351 = vst.msk [vmem:[#allocation3 + $0xe8] sm:$0xff] %vm169, %v319
        %352 = vst.msk [vmem:[#allocation3 + $0xf0] sm:$0xff] %vm169, %v320
        %353 = vst.msk [vmem:[#allocation3 + $0xf8] sm:$0xff] %vm169, %v321
        %v354 = vld [vmem:[#allocation2 + $0x1] sm:$0xff]
        %v355 = vld [vmem:[#allocation2 + $0x9] sm:$0xff]
        %v356 = vld [vmem:[#allocation2 + $0x19] sm:$0xff]
        %v357 = vld [vmem:[#allocation2 + $0x21] sm:$0xff]
        %v358 = vld [vmem:[#allocation2 + $0x31] sm:$0xff]
        %v359 = vld [vmem:[#allocation2 + $0x39] sm:$0xff]
        %v360 = vld [vmem:[#allocation2 + $0x49] sm:$0xff]
        %v361 = vld [vmem:[#allocation2 + $0x51] sm:$0xff]
        %v362 = vld [vmem:[#allocation2 + $0x61] sm:$0xff]
        %v363 = vld [vmem:[#allocation2 + $0x69] sm:$0xff]
        %v364 = vld [vmem:[#allocation2 + $0x79] sm:$0xff]
        %v365 = vld [vmem:[#allocation2 + $0x81] sm:$0xff]
        %v366 = vld [vmem:[#allocation2 + $0x91] sm:$0xff]
        %v367 = vld [vmem:[#allocation2 + $0x99] sm:$0xff]
        %v368 = vld [vmem:[#allocation2 + $0xa9] sm:$0xff]
        %v369 = vld [vmem:[#allocation2 + $0xb1] sm:$0xff]
        %v370 = vld [vmem:[#allocation2 + $0xc1] sm:$0xff]
        %v371 = vld [vmem:[#allocation2 + $0xc9] sm:$0xff]
        %v372 = vld [vmem:[#allocation2 + $0xd9] sm:$0xff]
        %v373 = vld [vmem:[#allocation2 + $0xe1] sm:$0xff]
        %v374 = vld [vmem:[#allocation2 + $0xf1] sm:$0xff]
        %v375 = vld [vmem:[#allocation2 + $0xf9] sm:$0xff]
        %v376 = vld [vmem:[#allocation2 + $0x109] sm:$0xff]
        %v377 = vld [vmem:[#allocation2 + $0x111] sm:$0xff]
        %v378 = vld [vmem:[#allocation2 + $0x121] sm:$0xff]
        %v379 = vld [vmem:[#allocation2 + $0x129] sm:$0xff]
        %v380 = vld [vmem:[#allocation2 + $0x139] sm:$0xff]
        %v381 = vld [vmem:[#allocation2 + $0x141] sm:$0xff]
        %v382 = vld [vmem:[#allocation2 + $0x151] sm:$0xff]
        %v383 = vld [vmem:[#allocation2 + $0x159] sm:$0xff]
        %v384 = vld [vmem:[#allocation2 + $0x169] sm:$0xff]
        %v385 = vld [vmem:[#allocation2 + $0x171] sm:$0xff]
        %418 = vrot.lane.b32.xlu0 %v354, 4
        %v419 = vpop.permute.xlu0 %418
        %420 = vrot.lane.b32.xlu0 %v355, 4
        %v421 = vpop.permute.xlu0 %420
        %422 = vrot.lane.b32.xlu0 %v356, 4
        %v423 = vpop.permute.xlu0 %422
        %424 = vrot.lane.b32.xlu0 %v357, 4
        %v425 = vpop.permute.xlu0 %424
        %426 = vrot.lane.b32.xlu0 %v358, 4
        %v427 = vpop.permute.xlu0 %426
        %428 = vrot.lane.b32.xlu0 %v359, 4
        %v429 = vpop.permute.xlu0 %428
        %430 = vrot.lane.b32.xlu0 %v360, 4
        %v431 = vpop.permute.xlu0 %430
        %432 = vrot.lane.b32.xlu0 %v361, 4
        %v433 = vpop.permute.xlu0 %432
        %434 = vrot.lane.b32.xlu0 %v362, 4
        %v435 = vpop.permute.xlu0 %434
        %436 = vrot.lane.b32.xlu0 %v363, 4
        %v437 = vpop.permute.xlu0 %436
        %438 = vrot.lane.b32.xlu0 %v364, 4
        %v439 = vpop.permute.xlu0 %438
        %440 = vrot.lane.b32.xlu0 %v365, 4
        %v441 = vpop.permute.xlu0 %440
        %442 = vrot.lane.b32.xlu0 %v366, 4
        %v443 = vpop.permute.xlu0 %442
        %444 = vrot.lane.b32.xlu0 %v367, 4
        %v445 = vpop.permute.xlu0 %444
        %446 = vrot.lane.b32.xlu0 %v368, 4
        %v447 = vpop.permute.xlu0 %446
        %448 = vrot.lane.b32.xlu0 %v369, 4
        %v449 = vpop.permute.xlu0 %448
        %450 = vrot.lane.b32.xlu0 %v370, 4
        %v451 = vpop.permute.xlu0 %450
        %452 = vrot.lane.b32.xlu0 %v371, 4
        %v453 = vpop.permute.xlu0 %452
        %454 = vrot.lane.b32.xlu0 %v372, 4
        %v455 = vpop.permute.xlu0 %454
        %456 = vrot.lane.b32.xlu0 %v373, 4
        %v457 = vpop.permute.xlu0 %456
        %458 = vrot.lane.b32.xlu0 %v374, 4
        %v459 = vpop.permute.xlu0 %458
        %460 = vrot.lane.b32.xlu0 %v375, 4
        %v461 = vpop.permute.xlu0 %460
        %462 = vrot.lane.b32.xlu0 %v376, 4
        %v463 = vpop.permute.xlu0 %462
        %464 = vrot.lane.b32.xlu0 %v377, 4
        %v465 = vpop.permute.xlu0 %464
        %466 = vrot.lane.b32.xlu0 %v378, 4
        %v467 = vpop.permute.xlu0 %466
        %468 = vrot.lane.b32.xlu0 %v379, 4
        %v469 = vpop.permute.xlu0 %468
        %470 = vrot.lane.b32.xlu0 %v380, 4
        %v471 = vpop.permute.xlu0 %470
        %472 = vrot.lane.b32.xlu0 %v381, 4
        %v473 = vpop.permute.xlu0 %472
        %474 = vrot.lane.b32.xlu0 %v382, 4
        %v475 = vpop.permute.xlu0 %474
        %476 = vrot.lane.b32.xlu0 %v383, 4
        %v477 = vpop.permute.xlu0 %476
        %478 = vrot.lane.b32.xlu0 %v384, 4
        %v479 = vpop.permute.xlu0 %478
        %480 = vrot.lane.b32.xlu0 %v385, 4
        %v481 = vpop.permute.xlu0 %480
        %vm514 = vcmask 64544
        %515 = vst.msk [vmem:[#allocation3] sm:$0xff] %vm514, %v419
        %516 = vst.msk [vmem:[#allocation3 + $0x8] sm:$0xff] %vm514, %v421
        %517 = vst.msk [vmem:[#allocation3 + $0x10] sm:$0xff] %vm514, %v423
        %518 = vst.msk [vmem:[#allocation3 + $0x18] sm:$0xff] %vm514, %v425
        %519 = vst.msk [vmem:[#allocation3 + $0x20] sm:$0xff] %vm514, %v427
        %520 = vst.msk [vmem:[#allocation3 + $0x28] sm:$0xff] %vm514, %v429
        %521 = vst.msk [vmem:[#allocation3 + $0x30] sm:$0xff] %vm514, %v431
        %522 = vst.msk [vmem:[#allocation3 + $0x38] sm:$0xff] %vm514, %v433
        %523 = vst.msk [vmem:[#allocation3 + $0x40] sm:$0xff] %vm514, %v435
        %524 = vst.msk [vmem:[#allocation3 + $0x48] sm:$0xff] %vm514, %v437
        %525 = vst.msk [vmem:[#allocation3 + $0x50] sm:$0xff] %vm514, %v439
        %526 = vst.msk [vmem:[#allocation3 + $0x58] sm:$0xff] %vm514, %v441
        %527 = vst.msk [vmem:[#allocation3 + $0x60] sm:$0xff] %vm514, %v443
        %528 = vst.msk [vmem:[#allocation3 + $0x68] sm:$0xff] %vm514, %v445
        %529 = vst.msk [vmem:[#allocation3 + $0x70] sm:$0xff] %vm514, %v447
        %530 = vst.msk [vmem:[#allocation3 + $0x78] sm:$0xff] %vm514, %v449
        %531 = vst.msk [vmem:[#allocation3 + $0x80] sm:$0xff] %vm514, %v451
        %532 = vst.msk [vmem:[#allocation3 + $0x88] sm:$0xff] %vm514, %v453
        %533 = vst.msk [vmem:[#allocation3 + $0x90] sm:$0xff] %vm514, %v455
        %534 = vst.msk [vmem:[#allocation3 + $0x98] sm:$0xff] %vm514, %v457
        %535 = vst.msk [vmem:[#allocation3 + $0xa0] sm:$0xff] %vm514, %v459
        %536 = vst.msk [vmem:[#allocation3 + $0xa8] sm:$0xff] %vm514, %v461
        %537 = vst.msk [vmem:[#allocation3 + $0xb0] sm:$0xff] %vm514, %v463
        %538 = vst.msk [vmem:[#allocation3 + $0xb8] sm:$0xff] %vm514, %v465
        %539 = vst.msk [vmem:[#allocation3 + $0xc0] sm:$0xff] %vm514, %v467
        %540 = vst.msk [vmem:[#allocation3 + $0xc8] sm:$0xff] %vm514, %v469
        %541 = vst.msk [vmem:[#allocation3 + $0xd0] sm:$0xff] %vm514, %v471
        %542 = vst.msk [vmem:[#allocation3 + $0xd8] sm:$0xff] %vm514, %v473
        %543 = vst.msk [vmem:[#allocation3 + $0xe0] sm:$0xff] %vm514, %v475
        %544 = vst.msk [vmem:[#allocation3 + $0xe8] sm:$0xff] %vm514, %v477
        %545 = vst.msk [vmem:[#allocation3 + $0xf0] sm:$0xff] %vm514, %v479
        %546 = vst.msk [vmem:[#allocation3 + $0xf8] sm:$0xff] %vm514, %v481
        %v547 = vld [vmem:[#allocation2 + $0x2] sm:$0xff]
        %v548 = vld [vmem:[#allocation2 + $0xa] sm:$0xff]
        %v549 = vld [vmem:[#allocation2 + $0x1a] sm:$0xff]
        %v550 = vld [vmem:[#allocation2 + $0x22] sm:$0xff]
        %v551 = vld [vmem:[#allocation2 + $0x32] sm:$0xff]
        %v552 = vld [vmem:[#allocation2 + $0x3a] sm:$0xff]
        %v553 = vld [vmem:[#allocation2 + $0x4a] sm:$0xff]
        %v554 = vld [vmem:[#allocation2 + $0x52] sm:$0xff]
        %v555 = vld [vmem:[#allocation2 + $0x62] sm:$0xff]
        %v556 = vld [vmem:[#allocation2 + $0x6a] sm:$0xff]
        %v557 = vld [vmem:[#allocation2 + $0x7a] sm:$0xff]
        %v558 = vld [vmem:[#allocation2 + $0x82] sm:$0xff]
        %v559 = vld [vmem:[#allocation2 + $0x92] sm:$0xff]
        %v560 = vld [vmem:[#allocation2 + $0x9a] sm:$0xff]
        %v561 = vld [vmem:[#allocation2 + $0xaa] sm:$0xff]
        %v562 = vld [vmem:[#allocation2 + $0xb2] sm:$0xff]
        %v563 = vld [vmem:[#allocation2 + $0xc2] sm:$0xff]
        %v564 = vld [vmem:[#allocation2 + $0xca] sm:$0xff]
        %v565 = vld [vmem:[#allocation2 + $0xda] sm:$0xff]
        %v566 = vld [vmem:[#allocation2 + $0xe2] sm:$0xff]
        %v567 = vld [vmem:[#allocation2 + $0xf2] sm:$0xff]
        %v568 = vld [vmem:[#allocation2 + $0xfa] sm:$0xff]
        %v569 = vld [vmem:[#allocation2 + $0x10a] sm:$0xff]
        %v570 = vld [vmem:[#allocation2 + $0x112] sm:$0xff]
        %v571 = vld [vmem:[#allocation2 + $0x122] sm:$0xff]
        %v572 = vld [vmem:[#allocation2 + $0x12a] sm:$0xff]
        %v573 = vld [vmem:[#allocation2 + $0x13a] sm:$0xff]
        %v574 = vld [vmem:[#allocation2 + $0x142] sm:$0xff]
        %v575 = vld [vmem:[#allocation2 + $0x152] sm:$0xff]
        %v576 = vld [vmem:[#allocation2 + $0x15a] sm:$0xff]
        %v577 = vld [vmem:[#allocation2 + $0x16a] sm:$0xff]
        %v578 = vld [vmem:[#allocation2 + $0x172] sm:$0xff]
        %611 = vrot.lane.b32.xlu0 %v547, 8
        %v612 = vpop.permute.xlu0 %611
        %613 = vrot.lane.b32.xlu0 %v548, 8
        %v614 = vpop.permute.xlu0 %613
        %615 = vrot.lane.b32.xlu0 %v549, 8
        %v616 = vpop.permute.xlu0 %615
        %617 = vrot.lane.b32.xlu0 %v550, 8
        %v618 = vpop.permute.xlu0 %617
        %619 = vrot.lane.b32.xlu0 %v551, 8
        %v620 = vpop.permute.xlu0 %619
        %621 = vrot.lane.b32.xlu0 %v552, 8
        %v622 = vpop.permute.xlu0 %621
        %623 = vrot.lane.b32.xlu0 %v553, 8
        %v624 = vpop.permute.xlu0 %623
        %625 = vrot.lane.b32.xlu0 %v554, 8
        %v626 = vpop.permute.xlu0 %625
        %627 = vrot.lane.b32.xlu0 %v555, 8
        %v628 = vpop.permute.xlu0 %627
        %629 = vrot.lane.b32.xlu0 %v556, 8
        %v630 = vpop.permute.xlu0 %629
        %631 = vrot.lane.b32.xlu0 %v557, 8
        %v632 = vpop.permute.xlu0 %631
        %633 = vrot.lane.b32.xlu0 %v558, 8
        %v634 = vpop.permute.xlu0 %633
        %635 = vrot.lane.b32.xlu0 %v559, 8
        %v636 = vpop.permute.xlu0 %635
        %637 = vrot.lane.b32.xlu0 %v560, 8
        %v638 = vpop.permute.xlu0 %637
        %639 = vrot.lane.b32.xlu0 %v561, 8
        %v640 = vpop.permute.xlu0 %639
        %641 = vrot.lane.b32.xlu0 %v562, 8
        %v642 = vpop.permute.xlu0 %641
        %643 = vrot.lane.b32.xlu0 %v563, 8
        %v644 = vpop.permute.xlu0 %643
        %645 = vrot.lane.b32.xlu0 %v564, 8
        %v646 = vpop.permute.xlu0 %645
        %647 = vrot.lane.b32.xlu0 %v565, 8
        %v648 = vpop.permute.xlu0 %647
        %649 = vrot.lane.b32.xlu0 %v566, 8
        %v650 = vpop.permute.xlu0 %649
        %651 = vrot.lane.b32.xlu0 %v567, 8
        %v652 = vpop.permute.xlu0 %651
        %653 = vrot.lane.b32.xlu0 %v568, 8
        %v654 = vpop.permute.xlu0 %653
        %655 = vrot.lane.b32.xlu0 %v569, 8
        %v656 = vpop.permute.xlu0 %655
        %657 = vrot.lane.b32.xlu0 %v570, 8
        %v658 = vpop.permute.xlu0 %657
        %659 = vrot.lane.b32.xlu0 %v571, 8
        %v660 = vpop.permute.xlu0 %659
        %661 = vrot.lane.b32.xlu0 %v572, 8
        %v662 = vpop.permute.xlu0 %661
        %663 = vrot.lane.b32.xlu0 %v573, 8
        %v664 = vpop.permute.xlu0 %663
        %665 = vrot.lane.b32.xlu0 %v574, 8
        %v666 = vpop.permute.xlu0 %665
        %667 = vrot.lane.b32.xlu0 %v575, 8
        %v668 = vpop.permute.xlu0 %667
        %669 = vrot.lane.b32.xlu0 %v576, 8
        %v670 = vpop.permute.xlu0 %669
        %671 = vrot.lane.b32.xlu0 %v577, 8
        %v672 = vpop.permute.xlu0 %671
        %673 = vrot.lane.b32.xlu0 %v578, 8
        %v674 = vpop.permute.xlu0 %673
        %vm707 = vcmask 97344
        %708 = vst.msk [vmem:[#allocation3] sm:$0xff] %vm707, %v612
        %709 = vst.msk [vmem:[#allocation3 + $0x8] sm:$0xff] %vm707, %v614
        %710 = vst.msk [vmem:[#allocation3 + $0x10] sm:$0xff] %vm707, %v616
        %711 = vst.msk [vmem:[#allocation3 + $0x18] sm:$0xff] %vm707, %v618
        %712 = vst.msk [vmem:[#allocation3 + $0x20] sm:$0xff] %vm707, %v620
        %713 = vst.msk [vmem:[#allocation3 + $0x28] sm:$0xff] %vm707, %v622
        %714 = vst.msk [vmem:[#allocation3 + $0x30] sm:$0xff] %vm707, %v624
        %715 = vst.msk [vmem:[#allocation3 + $0x38] sm:$0xff] %vm707, %v626
        %716 = vst.msk [vmem:[#allocation3 + $0x40] sm:$0xff] %vm707, %v628
        %717 = vst.msk [vmem:[#allocation3 + $0x48] sm:$0xff] %vm707, %v630
        %718 = vst.msk [vmem:[#allocation3 + $0x50] sm:$0xff] %vm707, %v632
        %719 = vst.msk [vmem:[#allocation3 + $0x58] sm:$0xff] %vm707, %v634
        %720 = vst.msk [vmem:[#allocation3 + $0x60] sm:$0xff] %vm707, %v636
        %721 = vst.msk [vmem:[#allocation3 + $0x68] sm:$0xff] %vm707, %v638
        %722 = vst.msk [vmem:[#allocation3 + $0x70] sm:$0xff] %vm707, %v640
        %723 = vst.msk [vmem:[#allocation3 + $0x78] sm:$0xff] %vm707, %v642
        %724 = vst.msk [vmem:[#allocation3 + $0x80] sm:$0xff] %vm707, %v644
        %725 = vst.msk [vmem:[#allocation3 + $0x88] sm:$0xff] %vm707, %v646
        %726 = vst.msk [vmem:[#allocation3 + $0x90] sm:$0xff] %vm707, %v648
        %727 = vst.msk [vmem:[#allocation3 + $0x98] sm:$0xff] %vm707, %v650
        %728 = vst.msk [vmem:[#allocation3 + $0xa0] sm:$0xff] %vm707, %v652
        %729 = vst.msk [vmem:[#allocation3 + $0xa8] sm:$0xff] %vm707, %v654
        %730 = vst.msk [vmem:[#allocation3 + $0xb0] sm:$0xff] %vm707, %v656
        %731 = vst.msk [vmem:[#allocation3 + $0xb8] sm:$0xff] %vm707, %v658
        %732 = vst.msk [vmem:[#allocation3 + $0xc0] sm:$0xff] %vm707, %v660
        %733 = vst.msk [vmem:[#allocation3 + $0xc8] sm:$0xff] %vm707, %v662
        %734 = vst.msk [vmem:[#allocation3 + $0xd0] sm:$0xff] %vm707, %v664
        %735 = vst.msk [vmem:[#allocation3 + $0xd8] sm:$0xff] %vm707, %v666
        %736 = vst.msk [vmem:[#allocation3 + $0xe0] sm:$0xff] %vm707, %v668
        %737 = vst.msk [vmem:[#allocation3 + $0xe8] sm:$0xff] %vm707, %v670
        %738 = vst.msk [vmem:[#allocation3 + $0xf0] sm:$0xff] %vm707, %v672
        %739 = vst.msk [vmem:[#allocation3 + $0xf8] sm:$0xff] %vm707, %v674
        %v740 = vld [vmem:[%s257] sm:$0xff]
        %v741 = vld [vmem:[%s257 + $0x8] sm:$0xff]
        %v742 = vld [vmem:[%s257 + $0x18] sm:$0xff]
        %v743 = vld [vmem:[%s257 + $0x20] sm:$0xff]
        %v744 = vld [vmem:[%s257 + $0x30] sm:$0xff]
        %v745 = vld [vmem:[%s257 + $0x38] sm:$0xff]
        %v746 = vld [vmem:[%s257 + $0x48] sm:$0xff]
        %v747 = vld [vmem:[%s257 + $0x50] sm:$0xff]
        %v748 = vld [vmem:[%s257 + $0x60] sm:$0xff]
        %v749 = vld [vmem:[%s257 + $0x68] sm:$0xff]
        %v750 = vld [vmem:[%s257 + $0x78] sm:$0xff]
        %v751 = vld [vmem:[%s257 + $0x80] sm:$0xff]
        %v752 = vld [vmem:[%s257 + $0x90] sm:$0xff]
        %v753 = vld [vmem:[%s257 + $0x98] sm:$0xff]
        %v754 = vld [vmem:[%s257 + $0xa8] sm:$0xff]
        %v755 = vld [vmem:[%s257 + $0xb0] sm:$0xff]
        %v756 = vld [vmem:[%s257 + $0xc0] sm:$0xff]
        %v757 = vld [vmem:[%s257 + $0xc8] sm:$0xff]
        %v758 = vld [vmem:[%s257 + $0xd8] sm:$0xff]
        %v759 = vld [vmem:[%s257 + $0xe0] sm:$0xff]
        %v760 = vld [vmem:[%s257 + $0xf0] sm:$0xff]
        %v761 = vld [vmem:[%s257 + $0xf8] sm:$0xff]
        %v762 = vld [vmem:[%s257 + $0x108] sm:$0xff]
        %v763 = vld [vmem:[%s257 + $0x110] sm:$0xff]
        %v764 = vld [vmem:[%s257 + $0x120] sm:$0xff]
        %v765 = vld [vmem:[%s257 + $0x128] sm:$0xff]
        %v766 = vld [vmem:[%s257 + $0x138] sm:$0xff]
        %v767 = vld [vmem:[%s257 + $0x140] sm:$0xff]
        %v768 = vld [vmem:[%s257 + $0x150] sm:$0xff]
        %v769 = vld [vmem:[%s257 + $0x158] sm:$0xff]
        %v770 = vld [vmem:[%s257 + $0x168] sm:$0xff]
        %v771 = vld [vmem:[%s257 + $0x170] sm:$0xff]
        %804 = vrot.lane.b32.xlu0 %v740, 12
        %v805 = vpop.permute.xlu0 %804
        %806 = vrot.lane.b32.xlu0 %v741, 12
        %v807 = vpop.permute.xlu0 %806
        %808 = vrot.lane.b32.xlu0 %v742, 12
        %v809 = vpop.permute.xlu0 %808
        %810 = vrot.lane.b32.xlu0 %v743, 12
        %v811 = vpop.permute.xlu0 %810
        %812 = vrot.lane.b32.xlu0 %v744, 12
        %v813 = vpop.permute.xlu0 %812
        %814 = vrot.lane.b32.xlu0 %v745, 12
        %v815 = vpop.permute.xlu0 %814
        %816 = vrot.lane.b32.xlu0 %v746, 12
        %v817 = vpop.permute.xlu0 %816
        %818 = vrot.lane.b32.xlu0 %v747, 12
        %v819 = vpop.permute.xlu0 %818
        %820 = vrot.lane.b32.xlu0 %v748, 12
        %v821 = vpop.permute.xlu0 %820
        %822 = vrot.lane.b32.xlu0 %v749, 12
        %v823 = vpop.permute.xlu0 %822
        %824 = vrot.lane.b32.xlu0 %v750, 12
        %v825 = vpop.permute.xlu0 %824
        %826 = vrot.lane.b32.xlu0 %v751, 12
        %v827 = vpop.permute.xlu0 %826
        %828 = vrot.lane.b32.xlu0 %v752, 12
        %v829 = vpop.permute.xlu0 %828
        %830 = vrot.lane.b32.xlu0 %v753, 12
        %v831 = vpop.permute.xlu0 %830
        %832 = vrot.lane.b32.xlu0 %v754, 12
        %v833 = vpop.permute.xlu0 %832
        %834 = vrot.lane.b32.xlu0 %v755, 12
        %v835 = vpop.permute.xlu0 %834
        %836 = vrot.lane.b32.xlu0 %v756, 12
        %v837 = vpop.permute.xlu0 %836
        %838 = vrot.lane.b32.xlu0 %v757, 12
        %v839 = vpop.permute.xlu0 %838
        %840 = vrot.lane.b32.xlu0 %v758, 12
        %v841 = vpop.permute.xlu0 %840
        %842 = vrot.lane.b32.xlu0 %v759, 12
        %v843 = vpop.permute.xlu0 %842
        %844 = vrot.lane.b32.xlu0 %v760, 12
        %v845 = vpop.permute.xlu0 %844
        %846 = vrot.lane.b32.xlu0 %v761, 12
        %v847 = vpop.permute.xlu0 %846
        %848 = vrot.lane.b32.xlu0 %v762, 12
        %v849 = vpop.permute.xlu0 %848
        %850 = vrot.lane.b32.xlu0 %v763, 12
        %v851 = vpop.permute.xlu0 %850
        %852 = vrot.lane.b32.xlu0 %v764, 12
        %v853 = vpop.permute.xlu0 %852
        %854 = vrot.lane.b32.xlu0 %v765, 12
        %v855 = vpop.permute.xlu0 %854
        %856 = vrot.lane.b32.xlu0 %v766, 12
        %v857 = vpop.permute.xlu0 %856
        %858 = vrot.lane.b32.xlu0 %v767, 12
        %v859 = vpop.permute.xlu0 %858
        %860 = vrot.lane.b32.xlu0 %v768, 12
        %v861 = vpop.permute.xlu0 %860
        %862 = vrot.lane.b32.xlu0 %v769, 12
        %v863 = vpop.permute.xlu0 %862
        %864 = vrot.lane.b32.xlu0 %v770, 12
        %v865 = vpop.permute.xlu0 %864
        %866 = vrot.lane.b32.xlu0 %v771, 12
        %v867 = vpop.permute.xlu0 %866
        %vm900 = vcmask 130144
        %901 = vst.msk [vmem:[#allocation3] sm:$0xff] %vm900, %v805
        %902 = vst.msk [vmem:[#allocation3 + $0x8] sm:$0xff] %vm900, %v807
        %903 = vst.msk [vmem:[#allocation3 + $0x10] sm:$0xff] %vm900, %v809
        %904 = vst.msk [vmem:[#allocation3 + $0x18] sm:$0xff] %vm900, %v811
        %905 = vst.msk [vmem:[#allocation3 + $0x20] sm:$0xff] %vm900, %v813
        %906 = vst.msk [vmem:[#allocation3 + $0x28] sm:$0xff] %vm900, %v815
        %907 = vst.msk [vmem:[#allocation3 + $0x30] sm:$0xff] %vm900, %v817
        %908 = vst.msk [vmem:[#allocation3 + $0x38] sm:$0xff] %vm900, %v819
        %909 = vst.msk [vmem:[#allocation3 + $0x40] sm:$0xff] %vm900, %v821
        %910 = vst.msk [vmem:[#allocation3 + $0x48] sm:$0xff] %vm900, %v823
        %911 = vst.msk [vmem:[#allocation3 + $0x50] sm:$0xff] %vm900, %v825
        %912 = vst.msk [vmem:[#allocation3 + $0x58] sm:$0xff] %vm900, %v827
        %913 = vst.msk [vmem:[#allocation3 + $0x60] sm:$0xff] %vm900, %v829
        %914 = vst.msk [vmem:[#allocation3 + $0x68] sm:$0xff] %vm900, %v831
        %915 = vst.msk [vmem:[#allocation3 + $0x70] sm:$0xff] %vm900, %v833
        %916 = vst.msk [vmem:[#allocation3 + $0x78] sm:$0xff] %vm900, %v835
        %917 = vst.msk [vmem:[#allocation3 + $0x80] sm:$0xff] %vm900, %v837
        %918 = vst.msk [vmem:[#allocation3 + $0x88] sm:$0xff] %vm900, %v839
        %919 = vst.msk [vmem:[#allocation3 + $0x90] sm:$0xff] %vm900, %v841
        %920 = vst.msk [vmem:[#allocation3 + $0x98] sm:$0xff] %vm900, %v843
        %921 = vst.msk [vmem:[#allocation3 + $0xa0] sm:$0xff] %vm900, %v845
        %922 = vst.msk [vmem:[#allocation3 + $0xa8] sm:$0xff] %vm900, %v847
        %923 = vst.msk [vmem:[#allocation3 + $0xb0] sm:$0xff] %vm900, %v849
        %924 = vst.msk [vmem:[#allocation3 + $0xb8] sm:$0xff] %vm900, %v851
        %925 = vst.msk [vmem:[#allocation3 + $0xc0] sm:$0xff] %vm900, %v853
        %926 = vst.msk [vmem:[#allocation3 + $0xc8] sm:$0xff] %vm900, %v855
        %927 = vst.msk [vmem:[#allocation3 + $0xd0] sm:$0xff] %vm900, %v857
        %928 = vst.msk [vmem:[#allocation3 + $0xd8] sm:$0xff] %vm900, %v859
        %929 = vst.msk [vmem:[#allocation3 + $0xe0] sm:$0xff] %vm900, %v861
        %930 = vst.msk [vmem:[#allocation3 + $0xe8] sm:$0xff] %vm900, %v863
        %931 = vst.msk [vmem:[#allocation3 + $0xf0] sm:$0xff] %vm900, %v865
        %932 = vst.msk [vmem:[#allocation3 + $0xf8] sm:$0xff] %vm900, %v867
        %v933 = vld [vmem:[%s257 + $0x1] sm:$0xff]
        %v934 = vld [vmem:[%s257 + $0x9] sm:$0xff]
        %v935 = vld [vmem:[%s257 + $0x19] sm:$0xff]
        %v936 = vld [vmem:[%s257 + $0x21] sm:$0xff]
        %v937 = vld [vmem:[%s257 + $0x31] sm:$0xff]
        %v938 = vld [vmem:[%s257 + $0x39] sm:$0xff]
        %v939 = vld [vmem:[%s257 + $0x49] sm:$0xff]
        %v940 = vld [vmem:[%s257 + $0x51] sm:$0xff]
        %v941 = vld [vmem:[%s257 + $0x61] sm:$0xff]
        %v942 = vld [vmem:[%s257 + $0x69] sm:$0xff]
        %v943 = vld [vmem:[%s257 + $0x79] sm:$0xff]
        %v944 = vld [vmem:[%s257 + $0x81] sm:$0xff]
        %v945 = vld [vmem:[%s257 + $0x91] sm:$0xff]
        %v946 = vld [vmem:[%s257 + $0x99] sm:$0xff]
        %v947 = vld [vmem:[%s257 + $0xa9] sm:$0xff]
        %v948 = vld [vmem:[%s257 + $0xb1] sm:$0xff]
        %v949 = vld [vmem:[%s257 + $0xc1] sm:$0xff]
        %v950 = vld [vmem:[%s257 + $0xc9] sm:$0xff]
        %v951 = vld [vmem:[%s257 + $0xd9] sm:$0xff]
        %v952 = vld [vmem:[%s257 + $0xe1] sm:$0xff]
        %v953 = vld [vmem:[%s257 + $0xf1] sm:$0xff]
        %v954 = vld [vmem:[%s257 + $0xf9] sm:$0xff]
        %v955 = vld [vmem:[%s257 + $0x109] sm:$0xff]
        %v956 = vld [vmem:[%s257 + $0x111] sm:$0xff]
        %v957 = vld [vmem:[%s257 + $0x121] sm:$0xff]
        %v958 = vld [vmem:[%s257 + $0x129] sm:$0xff]
        %v959 = vld [vmem:[%s257 + $0x139] sm:$0xff]
        %v960 = vld [vmem:[%s257 + $0x141] sm:$0xff]
        %v961 = vld [vmem:[%s257 + $0x151] sm:$0xff]
        %v962 = vld [vmem:[%s257 + $0x159] sm:$0xff]
        %v963 = vld [vmem:[%s257 + $0x169] sm:$0xff]
        %v964 = vld [vmem:[%s257 + $0x171] sm:$0xff]
        %997 = vrot.lane.b32.xlu0 %v933, 16
        %v998 = vpop.permute.xlu0 %997
        %999 = vrot.lane.b32.xlu0 %v934, 16
        %v1000 = vpop.permute.xlu0 %999
        %1001 = vrot.lane.b32.xlu0 %v935, 16
        %v1002 = vpop.permute.xlu0 %1001
        %1003 = vrot.lane.b32.xlu0 %v936, 16
        %v1004 = vpop.permute.xlu0 %1003
        %1005 = vrot.lane.b32.xlu0 %v937, 16
        %v1006 = vpop.permute.xlu0 %1005
        %1007 = vrot.lane.b32.xlu0 %v938, 16
        %v1008 = vpop.permute.xlu0 %1007
        %1009 = vrot.lane.b32.xlu0 %v939, 16
        %v1010 = vpop.permute.xlu0 %1009
        %1011 = vrot.lane.b32.xlu0 %v940, 16
        %v1012 = vpop.permute.xlu0 %1011
        %1013 = vrot.lane.b32.xlu0 %v941, 16
        %v1014 = vpop.permute.xlu0 %1013
        %1015 = vrot.lane.b32.xlu0 %v942, 16
        %v1016 = vpop.permute.xlu0 %1015
        %1017 = vrot.lane.b32.xlu0 %v943, 16
        %v1018 = vpop.permute.xlu0 %1017
        %1019 = vrot.lane.b32.xlu0 %v944, 16
        %v1020 = vpop.permute.xlu0 %1019
        %1021 = vrot.lane.b32.xlu0 %v945, 16
        %v1022 = vpop.permute.xlu0 %1021
        %1023 = vrot.lane.b32.xlu0 %v946, 16
        %v1024 = vpop.permute.xlu0 %1023
        %1025 = vrot.lane.b32.xlu0 %v947, 16
        %v1026 = vpop.permute.xlu0 %1025
        %1027 = vrot.lane.b32.xlu0 %v948, 16
        %v1028 = vpop.permute.xlu0 %1027
        %1029 = vrot.lane.b32.xlu0 %v949, 16
        %v1030 = vpop.permute.xlu0 %1029
        %1031 = vrot.lane.b32.xlu0 %v950, 16
        %v1032 = vpop.permute.xlu0 %1031
        %1033 = vrot.lane.b32.xlu0 %v951, 16
        %v1034 = vpop.permute.xlu0 %1033
        %1035 = vrot.lane.b32.xlu0 %v952, 16
        %v1036 = vpop.permute.xlu0 %1035
        %1037 = vrot.lane.b32.xlu0 %v953, 16
        %v1038 = vpop.permute.xlu0 %1037
        %1039 = vrot.lane.b32.xlu0 %v954, 16
        %v1040 = vpop.permute.xlu0 %1039
        %1041 = vrot.lane.b32.xlu0 %v955, 16
        %v1042 = vpop.permute.xlu0 %1041
        %1043 = vrot.lane.b32.xlu0 %v956, 16
        %v1044 = vpop.permute.xlu0 %1043
        %1045 = vrot.lane.b32.xlu0 %v957, 16
        %v1046 = vpop.permute.xlu0 %1045
        %1047 = vrot.lane.b32.xlu0 %v958, 16
        %v1048 = vpop.permute.xlu0 %1047
        %1049 = vrot.lane.b32.xlu0 %v959, 16
        %v1050 = vpop.permute.xlu0 %1049
        %1051 = vrot.lane.b32.xlu0 %v960, 16
        %v1052 = vpop.permute.xlu0 %1051
        %1053 = vrot.lane.b32.xlu0 %v961, 16
        %v1054 = vpop.permute.xlu0 %1053
        %1055 = vrot.lane.b32.xlu0 %v962, 16
        %v1056 = vpop.permute.xlu0 %1055
        %1057 = vrot.lane.b32.xlu0 %v963, 16
        %v1058 = vpop.permute.xlu0 %1057
        %1059 = vrot.lane.b32.xlu0 %v964, 16
        %v1060 = vpop.permute.xlu0 %1059
        %vm1093 = vcmask 162944
        %1094 = vst.msk [vmem:[#allocation3] sm:$0xff] %vm1093, %v998
        %1095 = vst.msk [vmem:[#allocation3 + $0x8] sm:$0xff] %vm1093, %v1000
        %1096 = vst.msk [vmem:[#allocation3 + $0x10] sm:$0xff] %vm1093, %v1002
        %1097 = vst.msk [vmem:[#allocation3 + $0x18] sm:$0xff] %vm1093, %v1004
        %1098 = vst.msk [vmem:[#allocation3 + $0x20] sm:$0xff] %vm1093, %v1006
        %1099 = vst.msk [vmem:[#allocation3 + $0x28] sm:$0xff] %vm1093, %v1008
        %1100 = vst.msk [vmem:[#allocation3 + $0x30] sm:$0xff] %vm1093, %v1010
        %1101 = vst.msk [vmem:[#allocation3 + $0x38] sm:$0xff] %vm1093, %v1012
        %1102 = vst.msk [vmem:[#allocation3 + $0x40] sm:$0xff] %vm1093, %v1014
        %1103 = vst.msk [vmem:[#allocation3 + $0x48] sm:$0xff] %vm1093, %v1016
        %1104 = vst.msk [vmem:[#allocation3 + $0x50] sm:$0xff] %vm1093, %v1018
        %1105 = vst.msk [vmem:[#allocation3 + $0x58] sm:$0xff] %vm1093, %v1020
        %1106 = vst.msk [vmem:[#allocation3 + $0x60] sm:$0xff] %vm1093, %v1022
        %1107 = vst.msk [vmem:[#allocation3 + $0x68] sm:$0xff] %vm1093, %v1024
        %1108 = vst.msk [vmem:[#allocation3 + $0x70] sm:$0xff] %vm1093, %v1026
        %1109 = vst.msk [vmem:[#allocation3 + $0x78] sm:$0xff] %vm1093, %v1028
        %1110 = vst.msk [vmem:[#allocation3 + $0x80] sm:$0xff] %vm1093, %v1030
        %1111 = vst.msk [vmem:[#allocation3 + $0x88] sm:$0xff] %vm1093, %v1032
        %1112 = vst.msk [vmem:[#allocation3 + $0x90] sm:$0xff] %vm1093, %v1034
        %1113 = vst.msk [vmem:[#allocation3 + $0x98] sm:$0xff] %vm1093, %v1036
        %1114 = vst.msk [vmem:[#allocation3 + $0xa0] sm:$0xff] %vm1093, %v1038
        %1115 = vst.msk [vmem:[#allocation3 + $0xa8] sm:$0xff] %vm1093, %v1040
        %1116 = vst.msk [vmem:[#allocation3 + $0xb0] sm:$0xff] %vm1093, %v1042
        %1117 = vst.msk [vmem:[#allocation3 + $0xb8] sm:$0xff] %vm1093, %v1044
        %1118 = vst.msk [vmem:[#allocation3 + $0xc0] sm:$0xff] %vm1093, %v1046
        %1119 = vst.msk [vmem:[#allocation3 + $0xc8] sm:$0xff] %vm1093, %v1048
        %1120 = vst.msk [vmem:[#allocation3 + $0xd0] sm:$0xff] %vm1093, %v1050
        %1121 = vst.msk [vmem:[#allocation3 + $0xd8] sm:$0xff] %vm1093, %v1052
        %1122 = vst.msk [vmem:[#allocation3 + $0xe0] sm:$0xff] %vm1093, %v1054
        %1123 = vst.msk [vmem:[#allocation3 + $0xe8] sm:$0xff] %vm1093, %v1056
        %1124 = vst.msk [vmem:[#allocation3 + $0xf0] sm:$0xff] %vm1093, %v1058
        %1125 = vst.msk [vmem:[#allocation3 + $0xf8] sm:$0xff] %vm1093, %v1060
        %v1126 = vld [vmem:[%s257 + $0x2] sm:$0xff]
        %v1127 = vld [vmem:[%s257 + $0xa] sm:$0xff]
        %v1128 = vld [vmem:[%s257 + $0x1a] sm:$0xff]
        %v1129 = vld [vmem:[%s257 + $0x22] sm:$0xff]
        %v1130 = vld [vmem:[%s257 + $0x32] sm:$0xff]
        %v1131 = vld [vmem:[%s257 + $0x3a] sm:$0xff]
        %v1132 = vld [vmem:[%s257 + $0x4a] sm:$0xff]
        %v1133 = vld [vmem:[%s257 + $0x52] sm:$0xff]
        %v1134 = vld [vmem:[%s257 + $0x62] sm:$0xff]
        %v1135 = vld [vmem:[%s257 + $0x6a] sm:$0xff]
        %v1136 = vld [vmem:[%s257 + $0x7a] sm:$0xff]
        %v1137 = vld [vmem:[%s257 + $0x82] sm:$0xff]
        %v1138 = vld [vmem:[%s257 + $0x92] sm:$0xff]
        %v1139 = vld [vmem:[%s257 + $0x9a] sm:$0xff]
        %v1140 = vld [vmem:[%s257 + $0xaa] sm:$0xff]
        %v1141 = vld [vmem:[%s257 + $0xb2] sm:$0xff]
        %v1142 = vld [vmem:[%s257 + $0xc2] sm:$0xff]
        %v1143 = vld [vmem:[%s257 + $0xca] sm:$0xff]
        %v1144 = vld [vmem:[%s257 + $0xda] sm:$0xff]
        %v1145 = vld [vmem:[%s257 + $0xe2] sm:$0xff]
        %v1146 = vld [vmem:[%s257 + $0xf2] sm:$0xff]
        %v1147 = vld [vmem:[%s257 + $0xfa] sm:$0xff]
        %v1148 = vld [vmem:[%s257 + $0x10a] sm:$0xff]
        %v1149 = vld [vmem:[%s257 + $0x112] sm:$0xff]
        %v1150 = vld [vmem:[%s257 + $0x122] sm:$0xff]
        %v1151 = vld [vmem:[%s257 + $0x12a] sm:$0xff]
        %v1152 = vld [vmem:[%s257 + $0x13a] sm:$0xff]
        %v1153 = vld [vmem:[%s257 + $0x142] sm:$0xff]
        %v1154 = vld [vmem:[%s257 + $0x152] sm:$0xff]
        %v1155 = vld [vmem:[%s257 + $0x15a] sm:$0xff]
        %v1156 = vld [vmem:[%s257 + $0x16a] sm:$0xff]
        %v1157 = vld [vmem:[%s257 + $0x172] sm:$0xff]
        %1190 = vrot.lane.b32.xlu0 %v1126, 20
        %v1191 = vpop.permute.xlu0 %1190
        %1192 = vrot.lane.b32.xlu0 %v1127, 20
        %v1193 = vpop.permute.xlu0 %1192
        %1194 = vrot.lane.b32.xlu0 %v1128, 20
        %v1195 = vpop.permute.xlu0 %1194
        %1196 = vrot.lane.b32.xlu0 %v1129, 20
        %v1197 = vpop.permute.xlu0 %1196
        %1198 = vrot.lane.b32.xlu0 %v1130, 20
        %v1199 = vpop.permute.xlu0 %1198
        %1200 = vrot.lane.b32.xlu0 %v1131, 20
        %v1201 = vpop.permute.xlu0 %1200
        %1202 = vrot.lane.b32.xlu0 %v1132, 20
        %v1203 = vpop.permute.xlu0 %1202
        %1204 = vrot.lane.b32.xlu0 %v1133, 20
        %v1205 = vpop.permute.xlu0 %1204
        %1206 = vrot.lane.b32.xlu0 %v1134, 20
        %v1207 = vpop.permute.xlu0 %1206
        %1208 = vrot.lane.b32.xlu0 %v1135, 20
        %v1209 = vpop.permute.xlu0 %1208
        %1210 = vrot.lane.b32.xlu0 %v1136, 20
        %v1211 = vpop.permute.xlu0 %1210
        %1212 = vrot.lane.b32.xlu0 %v1137, 20
        %v1213 = vpop.permute.xlu0 %1212
        %1214 = vrot.lane.b32.xlu0 %v1138, 20
        %v1215 = vpop.permute.xlu0 %1214
        %1216 = vrot.lane.b32.xlu0 %v1139, 20
        %v1217 = vpop.permute.xlu0 %1216
        %1218 = vrot.lane.b32.xlu0 %v1140, 20
        %v1219 = vpop.permute.xlu0 %1218
        %1220 = vrot.lane.b32.xlu0 %v1141, 20
        %v1221 = vpop.permute.xlu0 %1220
        %1222 = vrot.lane.b32.xlu0 %v1142, 20
        %v1223 = vpop.permute.xlu0 %1222
        %1224 = vrot.lane.b32.xlu0 %v1143, 20
        %v1225 = vpop.permute.xlu0 %1224
        %1226 = vrot.lane.b32.xlu0 %v1144, 20
        %v1227 = vpop.permute.xlu0 %1226
        %1228 = vrot.lane.b32.xlu0 %v1145, 20
        %v1229 = vpop.permute.xlu0 %1228
        %1230 = vrot.lane.b32.xlu0 %v1146, 20
        %v1231 = vpop.permute.xlu0 %1230
        %1232 = vrot.lane.b32.xlu0 %v1147, 20
        %v1233 = vpop.permute.xlu0 %1232
        %1234 = vrot.lane.b32.xlu0 %v1148, 20
        %v1235 = vpop.permute.xlu0 %1234
        %1236 = vrot.lane.b32.xlu0 %v1149, 20
        %v1237 = vpop.permute.xlu0 %1236
        %1238 = vrot.lane.b32.xlu0 %v1150, 20
        %v1239 = vpop.permute.xlu0 %1238
        %1240 = vrot.lane.b32.xlu0 %v1151, 20
        %v1241 = vpop.permute.xlu0 %1240
        %1242 = vrot.lane.b32.xlu0 %v1152, 20
        %v1243 = vpop.permute.xlu0 %1242
        %1244 = vrot.lane.b32.xlu0 %v1153, 20
        %v1245 = vpop.permute.xlu0 %1244
        %1246 = vrot.lane.b32.xlu0 %v1154, 20
        %v1247 = vpop.permute.xlu0 %1246
        %1248 = vrot.lane.b32.xlu0 %v1155, 20
        %v1249 = vpop.permute.xlu0 %1248
        %1250 = vrot.lane.b32.xlu0 %v1156, 20
        %v1251 = vpop.permute.xlu0 %1250
        %1252 = vrot.lane.b32.xlu0 %v1157, 20
        %v1253 = vpop.permute.xlu0 %1252
        %vm1286 = vcmask 195744
        %1287 = vst.msk [vmem:[#allocation3] sm:$0xff] %vm1286, %v1191
        %1288 = vst.msk [vmem:[#allocation3 + $0x8] sm:$0xff] %vm1286, %v1193
        %1289 = vst.msk [vmem:[#allocation3 + $0x10] sm:$0xff] %vm1286, %v1195
        %1290 = vst.msk [vmem:[#allocation3 + $0x18] sm:$0xff] %vm1286, %v1197
        %1291 = vst.msk [vmem:[#allocation3 + $0x20] sm:$0xff] %vm1286, %v1199
        %1292 = vst.msk [vmem:[#allocation3 + $0x28] sm:$0xff] %vm1286, %v1201
        %1293 = vst.msk [vmem:[#allocation3 + $0x30] sm:$0xff] %vm1286, %v1203
        %1294 = vst.msk [vmem:[#allocation3 + $0x38] sm:$0xff] %vm1286, %v1205
        %1295 = vst.msk [vmem:[#allocation3 + $0x40] sm:$0xff] %vm1286, %v1207
        %1296 = vst.msk [vmem:[#allocation3 + $0x48] sm:$0xff] %vm1286, %v1209
        %1297 = vst.msk [vmem:[#allocation3 + $0x50] sm:$0xff] %vm1286, %v1211
        %1298 = vst.msk [vmem:[#allocation3 + $0x58] sm:$0xff] %vm1286, %v1213
        %1299 = vst.msk [vmem:[#allocation3 + $0x60] sm:$0xff] %vm1286, %v1215
        %1300 = vst.msk [vmem:[#allocation3 + $0x68] sm:$0xff] %vm1286, %v1217
        %1301 = vst.msk [vmem:[#allocation3 + $0x70] sm:$0xff] %vm1286, %v1219
        %1302 = vst.msk [vmem:[#allocation3 + $0x78] sm:$0xff] %vm1286, %v1221
        %1303 = vst.msk [vmem:[#allocation3 + $0x80] sm:$0xff] %vm1286, %v1223
        %1304 = vst.msk [vmem:[#allocation3 + $0x88] sm:$0xff] %vm1286, %v1225
        %1305 = vst.msk [vmem:[#allocation3 + $0x90] sm:$0xff] %vm1286, %v1227
        %1306 = vst.msk [vmem:[#allocation3 + $0x98] sm:$0xff] %vm1286, %v1229
        %1307 = vst.msk [vmem:[#allocation3 + $0xa0] sm:$0xff] %vm1286, %v1231
        %1308 = vst.msk [vmem:[#allocation3 + $0xa8] sm:$0xff] %vm1286, %v1233
        %1309 = vst.msk [vmem:[#allocation3 + $0xb0] sm:$0xff] %vm1286, %v1235
        %1310 = vst.msk [vmem:[#allocation3 + $0xb8] sm:$0xff] %vm1286, %v1237
        %1311 = vst.msk [vmem:[#allocation3 + $0xc0] sm:$0xff] %vm1286, %v1239
        %1312 = vst.msk [vmem:[#allocation3 + $0xc8] sm:$0xff] %vm1286, %v1241
        %1313 = vst.msk [vmem:[#allocation3 + $0xd0] sm:$0xff] %vm1286, %v1243
        %1314 = vst.msk [vmem:[#allocation3 + $0xd8] sm:$0xff] %vm1286, %v1245
        %1315 = vst.msk [vmem:[#allocation3 + $0xe0] sm:$0xff] %vm1286, %v1247
        %1316 = vst.msk [vmem:[#allocation3 + $0xe8] sm:$0xff] %vm1286, %v1249
        %1317 = vst.msk [vmem:[#allocation3 + $0xf0] sm:$0xff] %vm1286, %v1251
        %1318 = vst.msk [vmem:[#allocation3 + $0xf8] sm:$0xff] %vm1286, %v1253
        %s1319 = scalar_lea.vmem [#allocation2], 48
        %v1320 = vld [vmem:[%s1319] sm:$0xff]
        %v1321 = vld [vmem:[%s1319 + $0x8] sm:$0xff]
        %v1322 = vld [vmem:[%s1319 + $0x18] sm:$0xff]
        %v1323 = vld [vmem:[%s1319 + $0x20] sm:$0xff]
        %v1324 = vld [vmem:[%s1319 + $0x30] sm:$0xff]
        %v1325 = vld [vmem:[%s1319 + $0x38] sm:$0xff]
        %v1326 = vld [vmem:[%s1319 + $0x48] sm:$0xff]
        %v1327 = vld [vmem:[%s1319 + $0x50] sm:$0xff]
        %v1328 = vld [vmem:[%s1319 + $0x60] sm:$0xff]
        %v1329 = vld [vmem:[%s1319 + $0x68] sm:$0xff]
        %v1330 = vld [vmem:[%s1319 + $0x78] sm:$0xff]
        %v1331 = vld [vmem:[%s1319 + $0x80] sm:$0xff]
        %v1332 = vld [vmem:[%s1319 + $0x90] sm:$0xff]
        %v1333 = vld [vmem:[%s1319 + $0x98] sm:$0xff]
        %v1334 = vld [vmem:[%s1319 + $0xa8] sm:$0xff]
        %v1335 = vld [vmem:[%s1319 + $0xb0] sm:$0xff]
        %v1336 = vld [vmem:[%s1319 + $0xc0] sm:$0xff]
        %v1337 = vld [vmem:[%s1319 + $0xc8] sm:$0xff]
        %v1338 = vld [vmem:[%s1319 + $0xd8] sm:$0xff]
        %v1339 = vld [vmem:[%s1319 + $0xe0] sm:$0xff]
        %v1340 = vld [vmem:[%s1319 + $0xf0] sm:$0xff]
        %v1341 = vld [vmem:[%s1319 + $0xf8] sm:$0xff]
        %v1342 = vld [vmem:[%s1319 + $0x108] sm:$0xff]
        %v1343 = vld [vmem:[%s1319 + $0x110] sm:$0xff]
        %v1344 = vld [vmem:[%s1319 + $0x120] sm:$0xff]
        %v1345 = vld [vmem:[%s1319 + $0x128] sm:$0xff]
        %v1346 = vld [vmem:[%s1319 + $0x138] sm:$0xff]
        %v1347 = vld [vmem:[%s1319 + $0x140] sm:$0xff]
        %v1348 = vld [vmem:[%s1319 + $0x150] sm:$0xff]
        %v1349 = vld [vmem:[%s1319 + $0x158] sm:$0xff]
        %v1350 = vld [vmem:[%s1319 + $0x168] sm:$0xff]
        %v1351 = vld [vmem:[%s1319 + $0x170] sm:$0xff]
        %1384 = vrot.lane.b32.xlu0 %v1320, 24
        %v1385 = vpop.permute.xlu0 %1384
        %1386 = vrot.lane.b32.xlu0 %v1321, 24
        %v1387 = vpop.permute.xlu0 %1386
        %1388 = vrot.lane.b32.xlu0 %v1322, 24
        %v1389 = vpop.permute.xlu0 %1388
        %1390 = vrot.lane.b32.xlu0 %v1323, 24
        %v1391 = vpop.permute.xlu0 %1390
        %1392 = vrot.lane.b32.xlu0 %v1324, 24
        %v1393 = vpop.permute.xlu0 %1392
        %1394 = vrot.lane.b32.xlu0 %v1325, 24
        %v1395 = vpop.permute.xlu0 %1394
        %1396 = vrot.lane.b32.xlu0 %v1326, 24
        %v1397 = vpop.permute.xlu0 %1396
        %1398 = vrot.lane.b32.xlu0 %v1327, 24
        %v1399 = vpop.permute.xlu0 %1398
        %1400 = vrot.lane.b32.xlu0 %v1328, 24
        %v1401 = vpop.permute.xlu0 %1400
        %1402 = vrot.lane.b32.xlu0 %v1329, 24
        %v1403 = vpop.permute.xlu0 %1402
        %1404 = vrot.lane.b32.xlu0 %v1330, 24
        %v1405 = vpop.permute.xlu0 %1404
        %1406 = vrot.lane.b32.xlu0 %v1331, 24
        %v1407 = vpop.permute.xlu0 %1406
        %1408 = vrot.lane.b32.xlu0 %v1332, 24
        %v1409 = vpop.permute.xlu0 %1408
        %1410 = vrot.lane.b32.xlu0 %v1333, 24
        %v1411 = vpop.permute.xlu0 %1410
        %1412 = vrot.lane.b32.xlu0 %v1334, 24
        %v1413 = vpop.permute.xlu0 %1412
        %1414 = vrot.lane.b32.xlu0 %v1335, 24
        %v1415 = vpop.permute.xlu0 %1414
        %1416 = vrot.lane.b32.xlu0 %v1336, 24
        %v1417 = vpop.permute.xlu0 %1416
        %1418 = vrot.lane.b32.xlu0 %v1337, 24
        %v1419 = vpop.permute.xlu0 %1418
        %1420 = vrot.lane.b32.xlu0 %v1338, 24
        %v1421 = vpop.permute.xlu0 %1420
        %1422 = vrot.lane.b32.xlu0 %v1339, 24
        %v1423 = vpop.permute.xlu0 %1422
        %1424 = vrot.lane.b32.xlu0 %v1340, 24
        %v1425 = vpop.permute.xlu0 %1424
        %1426 = vrot.lane.b32.xlu0 %v1341, 24
        %v1427 = vpop.permute.xlu0 %1426
        %1428 = vrot.lane.b32.xlu0 %v1342, 24
        %v1429 = vpop.permute.xlu0 %1428
        %1430 = vrot.lane.b32.xlu0 %v1343, 24
        %v1431 = vpop.permute.xlu0 %1430
        %1432 = vrot.lane.b32.xlu0 %v1344, 24
        %v1433 = vpop.permute.xlu0 %1432
        %1434 = vrot.lane.b32.xlu0 %v1345, 24
        %v1435 = vpop.permute.xlu0 %1434
        %1436 = vrot.lane.b32.xlu0 %v1346, 24
        %v1437 = vpop.permute.xlu0 %1436
        %1438 = vrot.lane.b32.xlu0 %v1347, 24
        %v1439 = vpop.permute.xlu0 %1438
        %1440 = vrot.lane.b32.xlu0 %v1348, 24
        %v1441 = vpop.permute.xlu0 %1440
        %1442 = vrot.lane.b32.xlu0 %v1349, 24
        %v1443 = vpop.permute.xlu0 %1442
        %1444 = vrot.lane.b32.xlu0 %v1350, 24
        %v1445 = vpop.permute.xlu0 %1444
        %1446 = vrot.lane.b32.xlu0 %v1351, 24
        %v1447 = vpop.permute.xlu0 %1446
        %vm1480 = vcmask 228544
        %1481 = vst.msk [vmem:[#allocation3] sm:$0xff] %vm1480, %v1385
        %1482 = vst.msk [vmem:[#allocation3 + $0x8] sm:$0xff] %vm1480, %v1387
        %1483 = vst.msk [vmem:[#allocation3 + $0x10] sm:$0xff] %vm1480, %v1389
        %1484 = vst.msk [vmem:[#allocation3 + $0x18] sm:$0xff] %vm1480, %v1391
        %1485 = vst.msk [vmem:[#allocation3 + $0x20] sm:$0xff] %vm1480, %v1393
        %1486 = vst.msk [vmem:[#allocation3 + $0x28] sm:$0xff] %vm1480, %v1395
        %1487 = vst.msk [vmem:[#allocation3 + $0x30] sm:$0xff] %vm1480, %v1397
        %1488 = vst.msk [vmem:[#allocation3 + $0x38] sm:$0xff] %vm1480, %v1399
        %1489 = vst.msk [vmem:[#allocation3 + $0x40] sm:$0xff] %vm1480, %v1401
        %1490 = vst.msk [vmem:[#allocation3 + $0x48] sm:$0xff] %vm1480, %v1403
        %1491 = vst.msk [vmem:[#allocation3 + $0x50] sm:$0xff] %vm1480, %v1405
        %1492 = vst.msk [vmem:[#allocation3 + $0x58] sm:$0xff] %vm1480, %v1407
        %1493 = vst.msk [vmem:[#allocation3 + $0x60] sm:$0xff] %vm1480, %v1409
        %1494 = vst.msk [vmem:[#allocation3 + $0x68] sm:$0xff] %vm1480, %v1411
        %1495 = vst.msk [vmem:[#allocation3 + $0x70] sm:$0xff] %vm1480, %v1413
        %1496 = vst.msk [vmem:[#allocation3 + $0x78] sm:$0xff] %vm1480, %v1415
        %1497 = vst.msk [vmem:[#allocation3 + $0x80] sm:$0xff] %vm1480, %v1417
        %1498 = vst.msk [vmem:[#allocation3 + $0x88] sm:$0xff] %vm1480, %v1419
        %1499 = vst.msk [vmem:[#allocation3 + $0x90] sm:$0xff] %vm1480, %v1421
        %1500 = vst.msk [vmem:[#allocation3 + $0x98] sm:$0xff] %vm1480, %v1423
        %1501 = vst.msk [vmem:[#allocation3 + $0xa0] sm:$0xff] %vm1480, %v1425
        %1502 = vst.msk [vmem:[#allocation3 + $0xa8] sm:$0xff] %vm1480, %v1427
        %1503 = vst.msk [vmem:[#allocation3 + $0xb0] sm:$0xff] %vm1480, %v1429
        %1504 = vst.msk [vmem:[#allocation3 + $0xb8] sm:$0xff] %vm1480, %v1431
        %1505 = vst.msk [vmem:[#allocation3 + $0xc0] sm:$0xff] %vm1480, %v1433
        %1506 = vst.msk [vmem:[#allocation3 + $0xc8] sm:$0xff] %vm1480, %v1435
        %1507 = vst.msk [vmem:[#allocation3 + $0xd0] sm:$0xff] %vm1480, %v1437
        %1508 = vst.msk [vmem:[#allocation3 + $0xd8] sm:$0xff] %vm1480, %v1439
        %1509 = vst.msk [vmem:[#allocation3 + $0xe0] sm:$0xff] %vm1480, %v1441
        %1510 = vst.msk [vmem:[#allocation3 + $0xe8] sm:$0xff] %vm1480, %v1443
        %1511 = vst.msk [vmem:[#allocation3 + $0xf0] sm:$0xff] %vm1480, %v1445
        %1512 = vst.msk [vmem:[#allocation3 + $0xf8] sm:$0xff] %vm1480, %v1447
        %v1513 = vld [vmem:[%s1319 + $0x1] sm:$0xff]
        %v1514 = vld [vmem:[%s1319 + $0x9] sm:$0xff]
        %v1515 = vld [vmem:[%s1319 + $0x19] sm:$0xff]
        %v1516 = vld [vmem:[%s1319 + $0x21] sm:$0xff]
        %v1517 = vld [vmem:[%s1319 + $0x31] sm:$0xff]
        %v1518 = vld [vmem:[%s1319 + $0x39] sm:$0xff]
        %v1519 = vld [vmem:[%s1319 + $0x49] sm:$0xff]
        %v1520 = vld [vmem:[%s1319 + $0x51] sm:$0xff]
        %v1521 = vld [vmem:[%s1319 + $0x61] sm:$0xff]
        %v1522 = vld [vmem:[%s1319 + $0x69] sm:$0xff]
        %v1523 = vld [vmem:[%s1319 + $0x79] sm:$0xff]
        %v1524 = vld [vmem:[%s1319 + $0x81] sm:$0xff]
        %v1525 = vld [vmem:[%s1319 + $0x91] sm:$0xff]
        %v1526 = vld [vmem:[%s1319 + $0x99] sm:$0xff]
        %v1527 = vld [vmem:[%s1319 + $0xa9] sm:$0xff]
        %v1528 = vld [vmem:[%s1319 + $0xb1] sm:$0xff]
        %v1529 = vld [vmem:[%s1319 + $0xc1] sm:$0xff]
        %v1530 = vld [vmem:[%s1319 + $0xc9] sm:$0xff]
        %v1531 = vld [vmem:[%s1319 + $0xd9] sm:$0xff]
        %v1532 = vld [vmem:[%s1319 + $0xe1] sm:$0xff]
        %v1533 = vld [vmem:[%s1319 + $0xf1] sm:$0xff]
        %v1534 = vld [vmem:[%s1319 + $0xf9] sm:$0xff]
        %v1535 = vld [vmem:[%s1319 + $0x109] sm:$0xff]
        %v1536 = vld [vmem:[%s1319 + $0x111] sm:$0xff]
        %v1537 = vld [vmem:[%s1319 + $0x121] sm:$0xff]
        %v1538 = vld [vmem:[%s1319 + $0x129] sm:$0xff]
        %v1539 = vld [vmem:[%s1319 + $0x139] sm:$0xff]
        %v1540 = vld [vmem:[%s1319 + $0x141] sm:$0xff]
        %v1541 = vld [vmem:[%s1319 + $0x151] sm:$0xff]
        %v1542 = vld [vmem:[%s1319 + $0x159] sm:$0xff]
        %v1543 = vld [vmem:[%s1319 + $0x169] sm:$0xff]
        %v1544 = vld [vmem:[%s1319 + $0x171] sm:$0xff]
        %1577 = vrot.lane.b32.xlu0 %v1513, 28
        %v1578 = vpop.permute.xlu0 %1577
        %1579 = vrot.lane.b32.xlu0 %v1514, 28
        %v1580 = vpop.permute.xlu0 %1579
        %1581 = vrot.lane.b32.xlu0 %v1515, 28
        %v1582 = vpop.permute.xlu0 %1581
        %1583 = vrot.lane.b32.xlu0 %v1516, 28
        %v1584 = vpop.permute.xlu0 %1583
        %1585 = vrot.lane.b32.xlu0 %v1517, 28
        %v1586 = vpop.permute.xlu0 %1585
        %1587 = vrot.lane.b32.xlu0 %v1518, 28
        %v1588 = vpop.permute.xlu0 %1587
        %1589 = vrot.lane.b32.xlu0 %v1519, 28
        %v1590 = vpop.permute.xlu0 %1589
        %1591 = vrot.lane.b32.xlu0 %v1520, 28
        %v1592 = vpop.permute.xlu0 %1591
        %1593 = vrot.lane.b32.xlu0 %v1521, 28
        %v1594 = vpop.permute.xlu0 %1593
        %1595 = vrot.lane.b32.xlu0 %v1522, 28
        %v1596 = vpop.permute.xlu0 %1595
        %1597 = vrot.lane.b32.xlu0 %v1523, 28
        %v1598 = vpop.permute.xlu0 %1597
        %1599 = vrot.lane.b32.xlu0 %v1524, 28
        %v1600 = vpop.permute.xlu0 %1599
        %1601 = vrot.lane.b32.xlu0 %v1525, 28
        %v1602 = vpop.permute.xlu0 %1601
        %1603 = vrot.lane.b32.xlu0 %v1526, 28
        %v1604 = vpop.permute.xlu0 %1603
        %1605 = vrot.lane.b32.xlu0 %v1527, 28
        %v1606 = vpop.permute.xlu0 %1605
        %1607 = vrot.lane.b32.xlu0 %v1528, 28
        %v1608 = vpop.permute.xlu0 %1607
        %1609 = vrot.lane.b32.xlu0 %v1529, 28
        %v1610 = vpop.permute.xlu0 %1609
        %1611 = vrot.lane.b32.xlu0 %v1530, 28
        %v1612 = vpop.permute.xlu0 %1611
        %1613 = vrot.lane.b32.xlu0 %v1531, 28
        %v1614 = vpop.permute.xlu0 %1613
        %1615 = vrot.lane.b32.xlu0 %v1532, 28
        %v1616 = vpop.permute.xlu0 %1615
        %1617 = vrot.lane.b32.xlu0 %v1533, 28
        %v1618 = vpop.permute.xlu0 %1617
        %1619 = vrot.lane.b32.xlu0 %v1534, 28
        %v1620 = vpop.permute.xlu0 %1619
        %1621 = vrot.lane.b32.xlu0 %v1535, 28
        %v1622 = vpop.permute.xlu0 %1621
        %1623 = vrot.lane.b32.xlu0 %v1536, 28
        %v1624 = vpop.permute.xlu0 %1623
        %1625 = vrot.lane.b32.xlu0 %v1537, 28
        %v1626 = vpop.permute.xlu0 %1625
        %1627 = vrot.lane.b32.xlu0 %v1538, 28
        %v1628 = vpop.permute.xlu0 %1627
        %1629 = vrot.lane.b32.xlu0 %v1539, 28
        %v1630 = vpop.permute.xlu0 %1629
        %1631 = vrot.lane.b32.xlu0 %v1540, 28
        %v1632 = vpop.permute.xlu0 %1631
        %1633 = vrot.lane.b32.xlu0 %v1541, 28
        %v1634 = vpop.permute.xlu0 %1633
        %1635 = vrot.lane.b32.xlu0 %v1542, 28
        %v1636 = vpop.permute.xlu0 %1635
        %1637 = vrot.lane.b32.xlu0 %v1543, 28
        %v1638 = vpop.permute.xlu0 %1637
        %1639 = vrot.lane.b32.xlu0 %v1544, 28
        %v1640 = vpop.permute.xlu0 %1639
        %vm1673 = vcmask 261344
        %1674 = vst.msk [vmem:[#allocation3] sm:$0xff] %vm1673, %v1578
        %1675 = vst.msk [vmem:[#allocation3 + $0x8] sm:$0xff] %vm1673, %v1580
        %1676 = vst.msk [vmem:[#allocation3 + $0x10] sm:$0xff] %vm1673, %v1582
        %1677 = vst.msk [vmem:[#allocation3 + $0x18] sm:$0xff] %vm1673, %v1584
        %1678 = vst.msk [vmem:[#allocation3 + $0x20] sm:$0xff] %vm1673, %v1586
        %1679 = vst.msk [vmem:[#allocation3 + $0x28] sm:$0xff] %vm1673, %v1588
        %1680 = vst.msk [vmem:[#allocation3 + $0x30] sm:$0xff] %vm1673, %v1590
        %1681 = vst.msk [vmem:[#allocation3 + $0x38] sm:$0xff] %vm1673, %v1592
        %1682 = vst.msk [vmem:[#allocation3 + $0x40] sm:$0xff] %vm1673, %v1594
        %1683 = vst.msk [vmem:[#allocation3 + $0x48] sm:$0xff] %vm1673, %v1596
        %1684 = vst.msk [vmem:[#allocation3 + $0x50] sm:$0xff] %vm1673, %v1598
        %1685 = vst.msk [vmem:[#allocation3 + $0x58] sm:$0xff] %vm1673, %v1600
        %1686 = vst.msk [vmem:[#allocation3 + $0x60] sm:$0xff] %vm1673, %v1602
        %1687 = vst.msk [vmem:[#allocation3 + $0x68] sm:$0xff] %vm1673, %v1604
        %1688 = vst.msk [vmem:[#allocation3 + $0x70] sm:$0xff] %vm1673, %v1606
        %1689 = vst.msk [vmem:[#allocation3 + $0x78] sm:$0xff] %vm1673, %v1608
        %1690 = vst.msk [vmem:[#allocation3 + $0x80] sm:$0xff] %vm1673, %v1610
        %1691 = vst.msk [vmem:[#allocation3 + $0x88] sm:$0xff] %vm1673, %v1612
        %1692 = vst.msk [vmem:[#allocation3 + $0x90] sm:$0xff] %vm1673, %v1614
        %1693 = vst.msk [vmem:[#allocation3 + $0x98] sm:$0xff] %vm1673, %v1616
        %1694 = vst.msk [vmem:[#allocation3 + $0xa0] sm:$0xff] %vm1673, %v1618
        %1695 = vst.msk [vmem:[#allocation3 + $0xa8] sm:$0xff] %vm1673, %v1620
        %1696 = vst.msk [vmem:[#allocation3 + $0xb0] sm:$0xff] %vm1673, %v1622
        %1697 = vst.msk [vmem:[#allocation3 + $0xb8] sm:$0xff] %vm1673, %v1624
        %1698 = vst.msk [vmem:[#allocation3 + $0xc0] sm:$0xff] %vm1673, %v1626
        %1699 = vst.msk [vmem:[#allocation3 + $0xc8] sm:$0xff] %vm1673, %v1628
        %1700 = vst.msk [vmem:[#allocation3 + $0xd0] sm:$0xff] %vm1673, %v1630
        %1701 = vst.msk [vmem:[#allocation3 + $0xd8] sm:$0xff] %vm1673, %v1632
        %1702 = vst.msk [vmem:[#allocation3 + $0xe0] sm:$0xff] %vm1673, %v1634
        %1703 = vst.msk [vmem:[#allocation3 + $0xe8] sm:$0xff] %vm1673, %v1636
        %1704 = vst.msk [vmem:[#allocation3 + $0xf0] sm:$0xff] %vm1673, %v1638
        %1705 = vst.msk [vmem:[#allocation3 + $0xf8] sm:$0xff] %vm1673, %v1640
        %v1706 = vld [vmem:[%s1319 + $0x2] sm:$0xff]
        %v1707 = vld [vmem:[%s1319 + $0xa] sm:$0xff]
        %v1708 = vld [vmem:[%s1319 + $0x1a] sm:$0xff]
        %v1709 = vld [vmem:[%s1319 + $0x22] sm:$0xff]
        %v1710 = vld [vmem:[%s1319 + $0x32] sm:$0xff]
        %v1711 = vld [vmem:[%s1319 + $0x3a] sm:$0xff]
        %v1712 = vld [vmem:[%s1319 + $0x4a] sm:$0xff]
        %v1713 = vld [vmem:[%s1319 + $0x52] sm:$0xff]
        %v1714 = vld [vmem:[%s1319 + $0x62] sm:$0xff]
        %v1715 = vld [vmem:[%s1319 + $0x6a] sm:$0xff]
        %v1716 = vld [vmem:[%s1319 + $0x7a] sm:$0xff]
        %v1717 = vld [vmem:[%s1319 + $0x82] sm:$0xff]
        %v1718 = vld [vmem:[%s1319 + $0x92] sm:$0xff]
        %v1719 = vld [vmem:[%s1319 + $0x9a] sm:$0xff]
        %v1720 = vld [vmem:[%s1319 + $0xaa] sm:$0xff]
        %v1721 = vld [vmem:[%s1319 + $0xb2] sm:$0xff]
        %v1722 = vld [vmem:[%s1319 + $0xc2] sm:$0xff]
        %v1723 = vld [vmem:[%s1319 + $0xca] sm:$0xff]
        %v1724 = vld [vmem:[%s1319 + $0xda] sm:$0xff]
        %v1725 = vld [vmem:[%s1319 + $0xe2] sm:$0xff]
        %v1726 = vld [vmem:[%s1319 + $0xf2] sm:$0xff]
        %v1727 = vld [vmem:[%s1319 + $0xfa] sm:$0xff]
        %v1728 = vld [vmem:[%s1319 + $0x10a] sm:$0xff]
        %v1729 = vld [vmem:[%s1319 + $0x112] sm:$0xff]
        %v1730 = vld [vmem:[%s1319 + $0x122] sm:$0xff]
        %v1731 = vld [vmem:[%s1319 + $0x12a] sm:$0xff]
        %v1732 = vld [vmem:[%s1319 + $0x13a] sm:$0xff]
        %v1733 = vld [vmem:[%s1319 + $0x142] sm:$0xff]
        %v1734 = vld [vmem:[%s1319 + $0x152] sm:$0xff]
        %v1735 = vld [vmem:[%s1319 + $0x15a] sm:$0xff]
        %v1736 = vld [vmem:[%s1319 + $0x16a] sm:$0xff]
        %v1737 = vld [vmem:[%s1319 + $0x172] sm:$0xff]
        %1770 = vrot.lane.b32.xlu0 %v1706, 32
        %v1771 = vpop.permute.xlu0 %1770
        %1772 = vrot.lane.b32.xlu0 %v1707, 32
        %v1773 = vpop.permute.xlu0 %1772
        %1774 = vrot.lane.b32.xlu0 %v1708, 32
        %v1775 = vpop.permute.xlu0 %1774
        %1776 = vrot.lane.b32.xlu0 %v1709, 32
        %v1777 = vpop.permute.xlu0 %1776
        %1778 = vrot.lane.b32.xlu0 %v1710, 32
        %v1779 = vpop.permute.xlu0 %1778
        %1780 = vrot.lane.b32.xlu0 %v1711, 32
        %v1781 = vpop.permute.xlu0 %1780
        %1782 = vrot.lane.b32.xlu0 %v1712, 32
        %v1783 = vpop.permute.xlu0 %1782
        %1784 = vrot.lane.b32.xlu0 %v1713, 32
        %v1785 = vpop.permute.xlu0 %1784
        %1786 = vrot.lane.b32.xlu0 %v1714, 32
        %v1787 = vpop.permute.xlu0 %1786
        %1788 = vrot.lane.b32.xlu0 %v1715, 32
        %v1789 = vpop.permute.xlu0 %1788
        %1790 = vrot.lane.b32.xlu0 %v1716, 32
        %v1791 = vpop.permute.xlu0 %1790
        %1792 = vrot.lane.b32.xlu0 %v1717, 32
        %v1793 = vpop.permute.xlu0 %1792
        %1794 = vrot.lane.b32.xlu0 %v1718, 32
        %v1795 = vpop.permute.xlu0 %1794
        %1796 = vrot.lane.b32.xlu0 %v1719, 32
        %v1797 = vpop.permute.xlu0 %1796
        %1798 = vrot.lane.b32.xlu0 %v1720, 32
        %v1799 = vpop.permute.xlu0 %1798
        %1800 = vrot.lane.b32.xlu0 %v1721, 32
        %v1801 = vpop.permute.xlu0 %1800
        %1802 = vrot.lane.b32.xlu0 %v1722, 32
        %v1803 = vpop.permute.xlu0 %1802
        %1804 = vrot.lane.b32.xlu0 %v1723, 32
        %v1805 = vpop.permute.xlu0 %1804
        %1806 = vrot.lane.b32.xlu0 %v1724, 32
        %v1807 = vpop.permute.xlu0 %1806
        %1808 = vrot.lane.b32.xlu0 %v1725, 32
        %v1809 = vpop.permute.xlu0 %1808
        %1810 = vrot.lane.b32.xlu0 %v1726, 32
        %v1811 = vpop.permute.xlu0 %1810
        %1812 = vrot.lane.b32.xlu0 %v1727, 32
        %v1813 = vpop.permute.xlu0 %1812
        %1814 = vrot.lane.b32.xlu0 %v1728, 32
        %v1815 = vpop.permute.xlu0 %1814
        %1816 = vrot.lane.b32.xlu0 %v1729, 32
        %v1817 = vpop.permute.xlu0 %1816
        %1818 = vrot.lane.b32.xlu0 %v1730, 32
        %v1819 = vpop.permute.xlu0 %1818
        %1820 = vrot.lane.b32.xlu0 %v1731, 32
        %v1821 = vpop.permute.xlu0 %1820
        %1822 = vrot.lane.b32.xlu0 %v1732, 32
        %v1823 = vpop.permute.xlu0 %1822
        %1824 = vrot.lane.b32.xlu0 %v1733, 32
        %v1825 = vpop.permute.xlu0 %1824
        %1826 = vrot.lane.b32.xlu0 %v1734, 32
        %v1827 = vpop.permute.xlu0 %1826
        %1828 = vrot.lane.b32.xlu0 %v1735, 32
        %v1829 = vpop.permute.xlu0 %1828
        %1830 = vrot.lane.b32.xlu0 %v1736, 32
        %v1831 = vpop.permute.xlu0 %1830
        %1832 = vrot.lane.b32.xlu0 %v1737, 32
        %v1833 = vpop.permute.xlu0 %1832
        %vm1866 = vcmask 294144
        %1867 = vst.msk [vmem:[#allocation3] sm:$0xff] %vm1866, %v1771
        %1868 = vst.msk [vmem:[#allocation3 + $0x8] sm:$0xff] %vm1866, %v1773
        %1869 = vst.msk [vmem:[#allocation3 + $0x10] sm:$0xff] %vm1866, %v1775
        %1870 = vst.msk [vmem:[#allocation3 + $0x18] sm:$0xff] %vm1866, %v1777
        %1871 = vst.msk [vmem:[#allocation3 + $0x20] sm:$0xff] %vm1866, %v1779
        %1872 = vst.msk [vmem:[#allocation3 + $0x28] sm:$0xff] %vm1866, %v1781
        %1873 = vst.msk [vmem:[#allocation3 + $0x30] sm:$0xff] %vm1866, %v1783
        %1874 = vst.msk [vmem:[#allocation3 + $0x38] sm:$0xff] %vm1866, %v1785
        %1875 = vst.msk [vmem:[#allocation3 + $0x40] sm:$0xff] %vm1866, %v1787
        %1876 = vst.msk [vmem:[#allocation3 + $0x48] sm:$0xff] %vm1866, %v1789
        %1877 = vst.msk [vmem:[#allocation3 + $0x50] sm:$0xff] %vm1866, %v1791
        %1878 = vst.msk [vmem:[#allocation3 + $0x58] sm:$0xff] %vm1866, %v1793
        %1879 = vst.msk [vmem:[#allocation3 + $0x60] sm:$0xff] %vm1866, %v1795
        %1880 = vst.msk [vmem:[#allocation3 + $0x68] sm:$0xff] %vm1866, %v1797
        %1881 = vst.msk [vmem:[#allocation3 + $0x70] sm:$0xff] %vm1866, %v1799
        %1882 = vst.msk [vmem:[#allocation3 + $0x78] sm:$0xff] %vm1866, %v1801
        %1883 = vst.msk [vmem:[#allocation3 + $0x80] sm:$0xff] %vm1866, %v1803
        %1884 = vst.msk [vmem:[#allocation3 + $0x88] sm:$0xff] %vm1866, %v1805
        %1885 = vst.msk [vmem:[#allocation3 + $0x90] sm:$0xff] %vm1866, %v1807
        %1886 = vst.msk [vmem:[#allocation3 + $0x98] sm:$0xff] %vm1866, %v1809
        %1887 = vst.msk [vmem:[#allocation3 + $0xa0] sm:$0xff] %vm1866, %v1811
        %1888 = vst.msk [vmem:[#allocation3 + $0xa8] sm:$0xff] %vm1866, %v1813
        %1889 = vst.msk [vmem:[#allocation3 + $0xb0] sm:$0xff] %vm1866, %v1815
        %1890 = vst.msk [vmem:[#allocation3 + $0xb8] sm:$0xff] %vm1866, %v1817
        %1891 = vst.msk [vmem:[#allocation3 + $0xc0] sm:$0xff] %vm1866, %v1819
        %1892 = vst.msk [vmem:[#allocation3 + $0xc8] sm:$0xff] %vm1866, %v1821
        %1893 = vst.msk [vmem:[#allocation3 + $0xd0] sm:$0xff] %vm1866, %v1823
        %1894 = vst.msk [vmem:[#allocation3 + $0xd8] sm:$0xff] %vm1866, %v1825
        %1895 = vst.msk [vmem:[#allocation3 + $0xe0] sm:$0xff] %vm1866, %v1827
        %1896 = vst.msk [vmem:[#allocation3 + $0xe8] sm:$0xff] %vm1866, %v1829
        %1897 = vst.msk [vmem:[#allocation3 + $0xf0] sm:$0xff] %vm1866, %v1831
        %1898 = vst.msk [vmem:[#allocation3 + $0xf8] sm:$0xff] %vm1866, %v1833
        %v1899 = vld [vmem:[#allocation3] sm:$0xff]
        %v1900 = vld [vmem:[#allocation3 + $0x8] sm:$0xff]
        %v1901 = vld [vmem:[#allocation3 + $0x10] sm:$0xff]
        %v1902 = vld [vmem:[#allocation3 + $0x18] sm:$0xff]
        %v1903 = vld [vmem:[#allocation3 + $0x20] sm:$0xff]
        %v1904 = vld [vmem:[#allocation3 + $0x28] sm:$0xff]
        %v1905 = vld [vmem:[#allocation3 + $0x30] sm:$0xff]
        %v1906 = vld [vmem:[#allocation3 + $0x38] sm:$0xff]
        %v1907 = vld [vmem:[#allocation3 + $0x40] sm:$0xff]
        %v1908 = vld [vmem:[#allocation3 + $0x48] sm:$0xff]
        %v1909 = vld [vmem:[#allocation3 + $0x50] sm:$0xff]
        %v1910 = vld [vmem:[#allocation3 + $0x58] sm:$0xff]
        %v1911 = vld [vmem:[#allocation3 + $0x60] sm:$0xff]
        %v1912 = vld [vmem:[#allocation3 + $0x68] sm:$0xff]
        %v1913 = vld [vmem:[#allocation3 + $0x70] sm:$0xff]
        %v1914 = vld [vmem:[#allocation3 + $0x78] sm:$0xff]
        %v1915 = vld [vmem:[#allocation3 + $0x80] sm:$0xff]
        %v1916 = vld [vmem:[#allocation3 + $0x88] sm:$0xff]
        %v1917 = vld [vmem:[#allocation3 + $0x90] sm:$0xff]
        %v1918 = vld [vmem:[#allocation3 + $0x98] sm:$0xff]
        %v1919 = vld [vmem:[#allocation3 + $0xa0] sm:$0xff]
        %v1920 = vld [vmem:[#allocation3 + $0xa8] sm:$0xff]
        %v1921 = vld [vmem:[#allocation3 + $0xb0] sm:$0xff]
        %v1922 = vld [vmem:[#allocation3 + $0xb8] sm:$0xff]
        %v1923 = vld [vmem:[#allocation3 + $0xc0] sm:$0xff]
        %v1924 = vld [vmem:[#allocation3 + $0xc8] sm:$0xff]
        %v1925 = vld [vmem:[#allocation3 + $0xd0] sm:$0xff]
        %v1926 = vld [vmem:[#allocation3 + $0xd8] sm:$0xff]
        %v1927 = vld [vmem:[#allocation3 + $0xe0] sm:$0xff]
        %v1928 = vld [vmem:[#allocation3 + $0xe8] sm:$0xff]
        %v1929 = vld [vmem:[#allocation3 + $0xf0] sm:$0xff]
        %v1930 = vld [vmem:[#allocation3 + $0xf8] sm:$0xff]
        %v1931 = vld [vmem:[%s1] sm:$0xff]
        %v1932 = vld [vmem:[%s1 + $0x8] sm:$0xff]
        %v1933 = vld [vmem:[%s1 + $0x10] sm:$0xff]
        %v1934 = vld [vmem:[%s1 + $0x18] sm:$0xff]
        %v1935 = vld [vmem:[%s1 + $0x20] sm:$0xf]
        %vm1936 = vcmask 293888
        %v1938 = vsel %vm1936, %v1899, 0
        %v1941 = vsel %vm1936, %v1900, 0
        %v1944 = vsel %vm1936, %v1901, 0
        %v1947 = vsel %vm1936, %v1902, 0
        %v1950 = vsel %vm1936, %v1903, 0
        %v1953 = vsel %vm1936, %v1904, 0
        %v1956 = vsel %vm1936, %v1905, 0
        %v1959 = vsel %vm1936, %v1906, 0
        %v1962 = vsel %vm1936, %v1907, 0
        %v1965 = vsel %vm1936, %v1908, 0
        %v1968 = vsel %vm1936, %v1909, 0
        %v1971 = vsel %vm1936, %v1910, 0
        %v1974 = vsel %vm1936, %v1911, 0
        %v1977 = vsel %vm1936, %v1912, 0
        %v1980 = vsel %vm1936, %v1913, 0
        %v1983 = vsel %vm1936, %v1914, 0
        %v1986 = vsel %vm1936, %v1915, 0
        %v1989 = vsel %vm1936, %v1916, 0
        %v1992 = vsel %vm1936, %v1917, 0
        %v1995 = vsel %vm1936, %v1918, 0
        %v1998 = vsel %vm1936, %v1919, 0
        %v2001 = vsel %vm1936, %v1920, 0
        %v2004 = vsel %vm1936, %v1921, 0
        %v2007 = vsel %vm1936, %v1922, 0
        %v2010 = vsel %vm1936, %v1923, 0
        %v2013 = vsel %vm1936, %v1924, 0
        %v2016 = vsel %vm1936, %v1925, 0
        %v2019 = vsel %vm1936, %v1926, 0
        %v2022 = vsel %vm1936, %v1927, 0
        %v2025 = vsel %vm1936, %v1928, 0
        %v2028 = vsel %vm1936, %v1929, 0
        %v2031 = vsel %vm1936, %v1930, 0
        %vm2033 = vcmask 1043456
        %v2035 = vsel %vm2033, %v1935, 0
        %2037 = vmatprep.subr.mxu0 0.0
        %2038 = vmatpush1.msra.mxu0 %v1931
        %2039 = vmatprep.subr.mxu0 0.0
        %2040 = vmatpush1.msra.mxu0 %v1932
        %2041 = vmatprep.subr.mxu0 0.0
        %2042 = vmatpush1.msra.mxu0 %v1933
        %2043 = vmatprep.subr.mxu0 0.0
        %2044 = vmatpush1.msra.mxu0 %v1934
        %2045 = vmatprep.subr.mxu0 0.0
        %2046 = vmatpush1.msra.mxu0 %v2035
        %2047 = vmatprep.subr.mxu0 0.0
        %2048 = vmatpush1.msra.mxu0 0.0
        %2049 = vmatprep.subr.mxu0 0.0
        %2050 = vmatpush1.msra.mxu0 0.0
        %2051 = vmatprep.subr.mxu0 0.0
        %2052 = vmatpush1.msra.mxu0 0.0
        %2053 = vmatprep.subr.mxu0 0.0
        %2054 = vmatpush1.msra.mxu0 0.0
        %2055 = vmatprep.subr.mxu0 0.0
        %2056 = vmatpush1.msra.mxu0 0.0
        %2057 = vmatprep.subr.mxu0 0.0
        %2058 = vmatpush1.msra.mxu0 0.0
        %2059 = vmatprep.subr.mxu0 0.0
        %2060 = vmatpush1.msra.mxu0 0.0
        %2061 = vmatprep.subr.mxu0 0.0
        %2062 = vmatpush1.msra.mxu0 0.0
        %2063 = vmatprep.subr.mxu0 0.0
        %2064 = vmatpush1.msra.mxu0 0.0
        %2065 = vmatprep.subr.mxu0 0.0
        %2066 = vmatpush1.msra.mxu0 0.0
        %2067 = vmatprep.subr.mxu0 0.0
        %2068 = vmatpush1.msra.mxu0 0.0
        %2069 = vmatprep.subr.mxu0 0.0
        %2070 = vmatpush1.msra.mxu0 0.0
        %2071 = vmatprep.subr.mxu0 0.0
        %2072 = vmatpush1.msra.mxu0 0.0
        %2073 = vmatprep.subr.mxu0 0.0
        %2074 = vmatpush1.msra.mxu0 0.0
        %2075 = vmatprep.subr.mxu0 0.0
        %2076 = vmatpush1.msra.mxu0 0.0
        %2077 = vmatprep.subr.mxu0 0.0
        %2078 = vmatpush1.msra.mxu0 0.0
        %2079 = vmatprep.subr.mxu0 0.0
        %2080 = vmatpush1.msra.mxu0 0.0
        %2081 = vmatprep.subr.mxu0 0.0
        %2082 = vmatpush1.msra.mxu0 0.0
        %2083 = vmatprep.subr.mxu0 0.0
        %2084 = vmatpush1.msra.mxu0 0.0
        %2085 = vmatprep.subr.mxu0 0.0
        %2086 = vmatpush1.msra.mxu0 0.0
        %2087 = vmatprep.subr.mxu0 0.0
        %2088 = vmatpush1.msra.mxu0 0.0
        %2089 = vmatprep.subr.mxu0 0.0
        %2090 = vmatpush1.msra.mxu0 0.0
        %2091 = vmatprep.subr.mxu0 0.0
        %2092 = vmatpush1.msra.mxu0 0.0
        %2093 = vmatprep.subr.mxu0 0.0
        %2094 = vmatpush1.msra.mxu0 0.0
        %2095 = vmatprep.subr.mxu0 0.0
        %2096 = vmatpush1.msra.mxu0 0.0
        %2097 = vmatprep.subr.mxu0 0.0
        %2098 = vmatpush1.msra.mxu0 0.0
        %2099 = vmatprep.subr.mxu0 0.0
        %2100 = vmatpush1.msra.mxu0 0.0
        %2101 = vmatprep.mubr.f32.mxu0 0.0
        %2102 = vmatmul.mubr.f32.gmra.mrb[0].mxu0 %v1938
        %v2103 = vpop.f32.mrb[0].mxu0
        %v2104 = vadd.f32 0.0, %v2103
        %v2105 = vpop.f32.mrb[0].mxu0
        %2106 = vmatprep.mubr.f32.mxu0 0.0
        %2107 = vmatmul.mubr.f32.gmra.mrb[0].mxu0 %v1941
        %v2108 = vpop.f32.mrb[0].mxu0
        %v2109 = vadd.f32 0.0, %v2108
        %v2110 = vpop.f32.mrb[0].mxu0
        %2111 = vmatprep.mubr.f32.mxu0 0.0
        %2112 = vmatmul.mubr.f32.gmra.mrb[0].mxu0 %v1944
        %v2113 = vpop.f32.mrb[0].mxu0
        %v2114 = vadd.f32 0.0, %v2113
        %v2115 = vpop.f32.mrb[0].mxu0
        %2116 = vmatprep.mubr.f32.mxu0 0.0
        %2117 = vmatmul.mubr.f32.gmra.mrb[0].mxu0 %v1947
        %v2118 = vpop.f32.mrb[0].mxu0
        %v2119 = vadd.f32 0.0, %v2118
        %v2120 = vpop.f32.mrb[0].mxu0
        %2121 = vmatprep.mubr.f32.mxu0 0.0
        %2122 = vmatmul.mubr.f32.gmra.mrb[0].mxu0 %v1950
        %v2123 = vpop.f32.mrb[0].mxu0
        %v2124 = vadd.f32 0.0, %v2123
        %v2125 = vpop.f32.mrb[0].mxu0
        %2126 = vmatprep.mubr.f32.mxu0 0.0
        %2127 = vmatmul.mubr.f32.gmra.mrb[0].mxu0 %v1953
        %v2128 = vpop.f32.mrb[0].mxu0
        %v2129 = vadd.f32 0.0, %v2128
        %v2130 = vpop.f32.mrb[0].mxu0
        %2131 = vmatprep.mubr.f32.mxu0 0.0
        %2132 = vmatmul.mubr.f32.gmra.mrb[0].mxu0 %v1956
        %v2133 = vpop.f32.mrb[0].mxu0
        %v2134 = vadd.f32 0.0, %v2133
        %v2135 = vpop.f32.mrb[0].mxu0
        %2136 = vmatprep.mubr.f32.mxu0 0.0
        %2137 = vmatmul.mubr.f32.gmra.mrb[0].mxu0 %v1959
        %v2138 = vpop.f32.mrb[0].mxu0
        %v2139 = vadd.f32 0.0, %v2138
        %v2140 = vpop.f32.mrb[0].mxu0
        %2141 = vmatprep.mubr.f32.mxu0 0.0
        %2142 = vmatmul.mubr.f32.gmra.mrb[0].mxu0 %v1962
        %v2143 = vpop.f32.mrb[0].mxu0
        %v2144 = vadd.f32 0.0, %v2143
        %v2145 = vpop.f32.mrb[0].mxu0
        %2146 = vmatprep.mubr.f32.mxu0 0.0
        %2147 = vmatmul.mubr.f32.gmra.mrb[0].mxu0 %v1965
        %v2148 = vpop.f32.mrb[0].mxu0
        %v2149 = vadd.f32 0.0, %v2148
        %v2150 = vpop.f32.mrb[0].mxu0
        %2151 = vmatprep.mubr.f32.mxu0 0.0
        %2152 = vmatmul.mubr.f32.gmra.mrb[0].mxu0 %v1968
        %v2153 = vpop.f32.mrb[0].mxu0
        %v2154 = vadd.f32 0.0, %v2153
        %v2155 = vpop.f32.mrb[0].mxu0
        %2156 = vmatprep.mubr.f32.mxu0 0.0
        %2157 = vmatmul.mubr.f32.gmra.mrb[0].mxu0 %v1971
        %v2158 = vpop.f32.mrb[0].mxu0
        %v2159 = vadd.f32 0.0, %v2158
        %v2160 = vpop.f32.mrb[0].mxu0
        %2161 = vmatprep.mubr.f32.mxu0 0.0
        %2162 = vmatmul.mubr.f32.gmra.mrb[0].mxu0 %v1974
        %v2163 = vpop.f32.mrb[0].mxu0
        %v2164 = vadd.f32 0.0, %v2163
        %v2165 = vpop.f32.mrb[0].mxu0
        %2166 = vmatprep.mubr.f32.mxu0 0.0
        %2167 = vmatmul.mubr.f32.gmra.mrb[0].mxu0 %v1977
        %v2168 = vpop.f32.mrb[0].mxu0
        %v2169 = vadd.f32 0.0, %v2168
        %v2170 = vpop.f32.mrb[0].mxu0
        %2171 = vmatprep.mubr.f32.mxu0 0.0
        %2172 = vmatmul.mubr.f32.gmra.mrb[0].mxu0 %v1980
        %v2173 = vpop.f32.mrb[0].mxu0
        %v2174 = vadd.f32 0.0, %v2173
        %v2175 = vpop.f32.mrb[0].mxu0
        %2176 = vmatprep.mubr.f32.mxu0 0.0
        %2177 = vmatmul.mubr.f32.gmra.mrb[0].mxu0 %v1983
        %v2178 = vpop.f32.mrb[0].mxu0
        %v2179 = vadd.f32 0.0, %v2178
        %v2180 = vpop.f32.mrb[0].mxu0
        %2181 = vmatprep.mubr.f32.mxu0 0.0
        %2182 = vmatmul.mubr.f32.gmra.mrb[0].mxu0 %v1986
        %v2183 = vpop.f32.mrb[0].mxu0
        %v2184 = vadd.f32 0.0, %v2183
        %v2185 = vpop.f32.mrb[0].mxu0
        %2186 = vmatprep.mubr.f32.mxu0 0.0
        %2187 = vmatmul.mubr.f32.gmra.mrb[0].mxu0 %v1989
        %v2188 = vpop.f32.mrb[0].mxu0
        %v2189 = vadd.f32 0.0, %v2188
        %v2190 = vpop.f32.mrb[0].mxu0
        %2191 = vmatprep.mubr.f32.mxu0 0.0
        %2192 = vmatmul.mubr.f32.gmra.mrb[0].mxu0 %v1992
        %v2193 = vpop.f32.mrb[0].mxu0
        %v2194 = vadd.f32 0.0, %v2193
        %v2195 = vpop.f32.mrb[0].mxu0
        %2196 = vmatprep.mubr.f32.mxu0 0.0
        %2197 = vmatmul.mubr.f32.gmra.mrb[0].mxu0 %v1995
        %v2198 = vpop.f32.mrb[0].mxu0
        %v2199 = vadd.f32 0.0, %v2198
        %v2200 = vpop.f32.mrb[0].mxu0
        %2201 = vmatprep.mubr.f32.mxu0 0.0
        %2202 = vmatmul.mubr.f32.gmra.mrb[0].mxu0 %v1998
        %v2203 = vpop.f32.mrb[0].mxu0
        %v2204 = vadd.f32 0.0, %v2203
        %v2205 = vpop.f32.mrb[0].mxu0
        %2206 = vmatprep.mubr.f32.mxu0 0.0
        %2207 = vmatmul.mubr.f32.gmra.mrb[0].mxu0 %v2001
        %v2208 = vpop.f32.mrb[0].mxu0
        %v2209 = vadd.f32 0.0, %v2208
        %v2210 = vpop.f32.mrb[0].mxu0
        %2211 = vmatprep.mubr.f32.mxu0 0.0
        %2212 = vmatmul.mubr.f32.gmra.mrb[0].mxu0 %v2004
        %v2213 = vpop.f32.mrb[0].mxu0
        %v2214 = vadd.f32 0.0, %v2213
        %v2215 = vpop.f32.mrb[0].mxu0
        %2216 = vmatprep.mubr.f32.mxu0 0.0
        %2217 = vmatmul.mubr.f32.gmra.mrb[0].mxu0 %v2007
        %v2218 = vpop.f32.mrb[0].mxu0
        %v2219 = vadd.f32 0.0, %v2218
        %v2220 = vpop.f32.mrb[0].mxu0
        %2221 = vmatprep.mubr.f32.mxu0 0.0
        %2222 = vmatmul.mubr.f32.gmra.mrb[0].mxu0 %v2010
        %v2223 = vpop.f32.mrb[0].mxu0
        %v2224 = vadd.f32 0.0, %v2223
        %v2225 = vpop.f32.mrb[0].mxu0
        %2226 = vmatprep.mubr.f32.mxu0 0.0
        %2227 = vmatmul.mubr.f32.gmra.mrb[0].mxu0 %v2013
        %v2228 = vpop.f32.mrb[0].mxu0
        %v2229 = vadd.f32 0.0, %v2228
        %v2230 = vpop.f32.mrb[0].mxu0
        %2231 = vmatprep.mubr.f32.mxu0 0.0
        %2232 = vmatmul.mubr.f32.gmra.mrb[0].mxu0 %v2016
        %v2233 = vpop.f32.mrb[0].mxu0
        %v2234 = vadd.f32 0.0, %v2233
        %v2235 = vpop.f32.mrb[0].mxu0
        %2236 = vmatprep.mubr.f32.mxu0 0.0
        %2237 = vmatmul.mubr.f32.gmra.mrb[0].mxu0 %v2019
        %v2238 = vpop.f32.mrb[0].mxu0
        %v2239 = vadd.f32 0.0, %v2238
        %v2240 = vpop.f32.mrb[0].mxu0
        %2241 = vmatprep.mubr.f32.mxu0 0.0
        %2242 = vmatmul.mubr.f32.gmra.mrb[0].mxu0 %v2022
        %v2243 = vpop.f32.mrb[0].mxu0
        %v2244 = vadd.f32 0.0, %v2243
        %v2245 = vpop.f32.mrb[0].mxu0
        %2246 = vmatprep.mubr.f32.mxu0 0.0
        %2247 = vmatmul.mubr.f32.gmra.mrb[0].mxu0 %v2025
        %v2248 = vpop.f32.mrb[0].mxu0
        %v2249 = vadd.f32 0.0, %v2248
        %v2250 = vpop.f32.mrb[0].mxu0
        %2251 = vmatprep.mubr.f32.mxu0 0.0
        %2252 = vmatmul.mubr.f32.gmra.mrb[0].mxu0 %v2028
        %v2253 = vpop.f32.mrb[0].mxu0
        %v2254 = vadd.f32 0.0, %v2253
        %v2255 = vpop.f32.mrb[0].mxu0
        %2256 = vmatprep.mubr.f32.mxu0 0.0
        %2257 = vmatmul.mubr.f32.gmra.mrb[0].mxu0 %v2031
        %v2258 = vpop.f32.mrb[0].mxu0
        %v2259 = vadd.f32 0.0, %v2258
        %v2260 = vpop.f32.mrb[0].mxu0
        %2261 = vdwg.mxu0
        %vm2262 = vcmask 64512
        %2263 = vst.msk [vmem:[#allocation4] sm:$0xff] %vm2262, %v2104
        %2264 = vst.msk [vmem:[#allocation4 + $0x8] sm:$0xff] %vm2262, %v2109
        %2265 = vst.msk [vmem:[#allocation4 + $0x10] sm:$0xff] %vm2262, %v2114
        %2266 = vst.msk [vmem:[#allocation4 + $0x18] sm:$0xff] %vm2262, %v2119
        %2267 = vst.msk [vmem:[#allocation4 + $0x20] sm:$0xff] %vm2262, %v2124
        %2268 = vst.msk [vmem:[#allocation4 + $0x28] sm:$0xff] %vm2262, %v2129
        %2269 = vst.msk [vmem:[#allocation4 + $0x30] sm:$0xff] %vm2262, %v2134
        %2270 = vst.msk [vmem:[#allocation4 + $0x38] sm:$0xff] %vm2262, %v2139
        %2271 = vst.msk [vmem:[#allocation4 + $0x40] sm:$0xff] %vm2262, %v2144
        %2272 = vst.msk [vmem:[#allocation4 + $0x48] sm:$0xff] %vm2262, %v2149
        %2273 = vst.msk [vmem:[#allocation4 + $0x50] sm:$0xff] %vm2262, %v2154
        %2274 = vst.msk [vmem:[#allocation4 + $0x58] sm:$0xff] %vm2262, %v2159
        %2275 = vst.msk [vmem:[#allocation4 + $0x60] sm:$0xff] %vm2262, %v2164
        %2276 = vst.msk [vmem:[#allocation4 + $0x68] sm:$0xff] %vm2262, %v2169
        %2277 = vst.msk [vmem:[#allocation4 + $0x70] sm:$0xff] %vm2262, %v2174
        %2278 = vst.msk [vmem:[#allocation4 + $0x78] sm:$0xff] %vm2262, %v2179
        %2279 = vst.msk [vmem:[#allocation4 + $0x80] sm:$0xff] %vm2262, %v2184
        %2280 = vst.msk [vmem:[#allocation4 + $0x88] sm:$0xff] %vm2262, %v2189
        %2281 = vst.msk [vmem:[#allocation4 + $0x90] sm:$0xff] %vm2262, %v2194
        %2282 = vst.msk [vmem:[#allocation4 + $0x98] sm:$0xff] %vm2262, %v2199
        %2283 = vst.msk [vmem:[#allocation4 + $0xa0] sm:$0xff] %vm2262, %v2204
        %2284 = vst.msk [vmem:[#allocation4 + $0xa8] sm:$0xff] %vm2262, %v2209
        %2285 = vst.msk [vmem:[#allocation4 + $0xb0] sm:$0xff] %vm2262, %v2214
        %2286 = vst.msk [vmem:[#allocation4 + $0xb8] sm:$0xff] %vm2262, %v2219
        %2287 = vst.msk [vmem:[#allocation4 + $0xc0] sm:$0xff] %vm2262, %v2224
        %2288 = vst.msk [vmem:[#allocation4 + $0xc8] sm:$0xff] %vm2262, %v2229
        %2289 = vst.msk [vmem:[#allocation4 + $0xd0] sm:$0xff] %vm2262, %v2234
        %2290 = vst.msk [vmem:[#allocation4 + $0xd8] sm:$0xff] %vm2262, %v2239
        %2291 = vst.msk [vmem:[#allocation4 + $0xe0] sm:$0xff] %vm2262, %v2244
        %2292 = vst.msk [vmem:[#allocation4 + $0xe8] sm:$0xff] %vm2262, %v2249
        %2293 = vst.msk [vmem:[#allocation4 + $0xf0] sm:$0xff] %vm2262, %v2254
        %2294 = vst.msk [vmem:[#allocation4 + $0xf8] sm:$0xff] %vm2262, %v2259
        %v2295 = vld [vmem:[#allocation4] ss:$2 sm:$0xff]
        %s2296 = scalar_lea.vmem [#allocation4], 16
        %v2297 = vld [vmem:[%s2296] ss:$2 sm:$0xff]
        %s2298 = scalar_lea.vmem [#allocation4], 32
        %v2299 = vld [vmem:[%s2298] ss:$2 sm:$0xff]
        %s2300 = scalar_lea.vmem [#allocation4], 48
        %v2301 = vld [vmem:[%s2300] ss:$2 sm:$0xff]
        %s2302 = scalar_lea.vmem [#allocation4], 64
        %v2303 = vld [vmem:[%s2302] ss:$2 sm:$0xff]
        %s2304 = scalar_lea.vmem [#allocation4], 80
        %v2305 = vld [vmem:[%s2304] ss:$2 sm:$0xff]
        %s2306 = scalar_lea.vmem [#allocation4], 96
        %v2307 = vld [vmem:[%s2306] ss:$2 sm:$0xff]
        %s2308 = scalar_lea.vmem [#allocation4], 112
        %v2309 = vld [vmem:[%s2308] ss:$2 sm:$0xff]
        %s2310 = scalar_lea.vmem [#allocation4], 128
        %v2311 = vld [vmem:[%s2310] ss:$2 sm:$0xff]
        %s2312 = scalar_lea.vmem [#allocation4], 144
        %v2313 = vld [vmem:[%s2312] ss:$2 sm:$0xff]
        %s2314 = scalar_lea.vmem [#allocation4], 160
        %v2315 = vld [vmem:[%s2314] ss:$2 sm:$0xff]
        %s2316 = scalar_lea.vmem [#allocation4], 176
        %v2317 = vld [vmem:[%s2316] ss:$2 sm:$0xff]
        %s2318 = scalar_lea.vmem [#allocation4], 192
        %v2319 = vld [vmem:[%s2318] ss:$2 sm:$0xff]
        %s2320 = scalar_lea.vmem [#allocation4], 208
        %v2321 = vld [vmem:[%s2320] ss:$2 sm:$0xff]
        %s2322 = scalar_lea.vmem [#allocation4], 224
        %v2323 = vld [vmem:[%s2322] ss:$2 sm:$0xff]
        %s2324 = scalar_lea.vmem [#allocation4], 240
        %v2325 = vld [vmem:[%s2324] ss:$2 sm:$0xff]
        %s2326 = scalar_lea.vmem [#allocation4], 1
        %v2327 = vld [vmem:[%s2326] ss:$2 sm:$0xff]
        %s2328 = scalar_lea.vmem [#allocation4], 17
        %v2329 = vld [vmem:[%s2328] ss:$2 sm:$0xff]
        %s2330 = scalar_lea.vmem [#allocation4], 33
        %v2331 = vld [vmem:[%s2330] ss:$2 sm:$0xff]
        %s2332 = scalar_lea.vmem [#allocation4], 49
        %v2333 = vld [vmem:[%s2332] ss:$2 sm:$0xff]
        %s2334 = scalar_lea.vmem [#allocation4], 65
        %v2335 = vld [vmem:[%s2334] ss:$2 sm:$0xff]
        %s2336 = scalar_lea.vmem [#allocation4], 81
        %v2337 = vld [vmem:[%s2336] ss:$2 sm:$0xff]
        %s2338 = scalar_lea.vmem [#allocation4], 97
        %v2339 = vld [vmem:[%s2338] ss:$2 sm:$0xff]
        %s2340 = scalar_lea.vmem [#allocation4], 113
        %v2341 = vld [vmem:[%s2340] ss:$2 sm:$0xff]
        %s2342 = scalar_lea.vmem [#allocation4], 129
        %v2343 = vld [vmem:[%s2342] ss:$2 sm:$0xff]
        %s2344 = scalar_lea.vmem [#allocation4], 145
        %v2345 = vld [vmem:[%s2344] ss:$2 sm:$0xff]
        %s2346 = scalar_lea.vmem [#allocation4], 161
        %v2347 = vld [vmem:[%s2346] ss:$2 sm:$0xff]
        %s2348 = scalar_lea.vmem [#allocation4], 177
        %v2349 = vld [vmem:[%s2348] ss:$2 sm:$0xff]
        %s2350 = scalar_lea.vmem [#allocation4], 193
        %v2351 = vld [vmem:[%s2350] ss:$2 sm:$0xff]
        %s2352 = scalar_lea.vmem [#allocation4], 209
        %v2353 = vld [vmem:[%s2352] ss:$2 sm:$0xff]
        %s2354 = scalar_lea.vmem [#allocation4], 225
        %v2355 = vld [vmem:[%s2354] ss:$2 sm:$0xff]
        %s2356 = scalar_lea.vmem [#allocation4], 241
        %v2357 = vld [vmem:[%s2356] ss:$2 sm:$0xff]
        %v2358 = vmax.f32 %v2295, %v2327
        %v2359 = vmax.f32 %v2297, %v2329
        %v2360 = vmax.f32 %v2299, %v2331
        %v2361 = vmax.f32 %v2301, %v2333
        %v2362 = vmax.f32 %v2303, %v2335
        %v2363 = vmax.f32 %v2305, %v2337
        %v2364 = vmax.f32 %v2307, %v2339
        %v2365 = vmax.f32 %v2309, %v2341
        %v2366 = vmax.f32 %v2311, %v2343
        %v2367 = vmax.f32 %v2313, %v2345
        %v2368 = vmax.f32 %v2315, %v2347
        %v2369 = vmax.f32 %v2317, %v2349
        %v2370 = vmax.f32 %v2319, %v2351
        %v2371 = vmax.f32 %v2321, %v2353
        %v2372 = vmax.f32 %v2323, %v2355
        %v2373 = vmax.f32 %v2325, %v2357
        %v2390 = vrot.slane %v2327, 7
        %v2391 = vrot.slane %v2329, 7
        %v2392 = vrot.slane %v2331, 7
        %v2393 = vrot.slane %v2333, 7
        %v2394 = vrot.slane %v2335, 7
        %v2395 = vrot.slane %v2337, 7
        %v2396 = vrot.slane %v2339, 7
        %v2397 = vrot.slane %v2341, 7
        %v2398 = vrot.slane %v2343, 7
        %v2399 = vrot.slane %v2345, 7
        %v2400 = vrot.slane %v2347, 7
        %v2401 = vrot.slane %v2349, 7
        %v2402 = vrot.slane %v2351, 7
        %v2403 = vrot.slane %v2353, 7
        %v2404 = vrot.slane %v2355, 7
        %v2405 = vrot.slane %v2357, 7
        %vm2422 = vcmask 1040384
        %v2423 = vsel %vm2422, -inf, %v2390
        %v2424 = vsel %vm2422, -inf, %v2391
        %v2425 = vsel %vm2422, -inf, %v2392
        %v2426 = vsel %vm2422, -inf, %v2393
        %v2427 = vsel %vm2422, -inf, %v2394
        %v2428 = vsel %vm2422, -inf, %v2395
        %v2429 = vsel %vm2422, -inf, %v2396
        %v2430 = vsel %vm2422, -inf, %v2397
        %v2431 = vsel %vm2422, -inf, %v2398
        %v2432 = vsel %vm2422, -inf, %v2399
        %v2433 = vsel %vm2422, -inf, %v2400
        %v2434 = vsel %vm2422, -inf, %v2401
        %v2435 = vsel %vm2422, -inf, %v2402
        %v2436 = vsel %vm2422, -inf, %v2403
        %v2437 = vsel %vm2422, -inf, %v2404
        %v2438 = vsel %vm2422, -inf, %v2405
        %v2439 = vmax.f32 %v2358, %v2423
        %v2440 = vmax.f32 %v2359, %v2424
        %v2441 = vmax.f32 %v2360, %v2425
        %v2442 = vmax.f32 %v2361, %v2426
        %v2443 = vmax.f32 %v2362, %v2427
        %v2444 = vmax.f32 %v2363, %v2428
        %v2445 = vmax.f32 %v2364, %v2429
        %v2446 = vmax.f32 %v2365, %v2430
        %v2447 = vmax.f32 %v2366, %v2431
        %v2448 = vmax.f32 %v2367, %v2432
        %v2449 = vmax.f32 %v2368, %v2433
        %v2450 = vmax.f32 %v2369, %v2434
        %v2451 = vmax.f32 %v2370, %v2435
        %v2452 = vmax.f32 %v2371, %v2436
        %v2453 = vmax.f32 %v2372, %v2437
        %v2454 = vmax.f32 %v2373, %v2438
        %v2455 = vmax.f32 %v2439, %v2440
        %v2456 = vmax.f32 %v2441, %v2442
        %v2457 = vmax.f32 %v2443, %v2444
        %v2458 = vmax.f32 %v2445, %v2446
        %v2459 = vmax.f32 %v2447, %v2448
        %v2460 = vmax.f32 %v2449, %v2450
        %v2461 = vmax.f32 %v2451, %v2452
        %v2462 = vmax.f32 %v2453, %v2454
        %v2463 = vmax.f32 %v2456, %v2440
        %v2464 = vmax.f32 %v2457, %v2442
        %v2465 = vmax.f32 %v2458, %v2444
        %v2466 = vmax.f32 %v2459, %v2446
        %v2467 = vmax.f32 %v2460, %v2448
        %v2468 = vmax.f32 %v2461, %v2450
        %v2469 = vmax.f32 %v2462, %v2452
        %v2470 = vld [vmem:[%s2] sm:$0x1]
        %v2472 = vlaneseq
        %v2473 = vshrl.u32 %v2472, 7
        %v2474 = vsub.s32 0, %v2473
        %v2475 = vrot.slane %v2470, %v2474
        %v2477 = vadd.f32 %v2455, %v2475
        %v2478 = vadd.f32 %v2463, %v2475
        %v2479 = vadd.f32 %v2464, %v2475
        %v2480 = vadd.f32 %v2465, %v2475
        %v2481 = vadd.f32 %v2466, %v2475
        %v2482 = vadd.f32 %v2467, %v2475
        %v2483 = vadd.f32 %v2468, %v2475
        %v2484 = vadd.f32 %v2469, %v2475
        %v2485 = vmax.f32 %v2477, 0.0
        %v2486 = vmax.f32 %v2478, 0.0
        %v2487 = vmax.f32 %v2479, 0.0
        %v2488 = vmax.f32 %v2480, 0.0
        %v2489 = vmax.f32 %v2481, 0.0
        %v2490 = vmax.f32 %v2482, 0.0
        %v2491 = vmax.f32 %v2483, 0.0
        %v2492 = vmax.f32 %v2484, 0.0
        %2493 = vst.msk [vmem:[%s163] sm:$0xff] %vm2262, %v2485
        %2494 = vst.msk [vmem:[%s163 + $0x8] sm:$0xff] %vm2262, %v2486
        %2495 = vst.msk [vmem:[%s163 + $0x10] sm:$0xff] %vm2262, %v2487
        %2496 = vst.msk [vmem:[%s163 + $0x18] sm:$0xff] %vm2262, %v2488
        %2497 = vst.msk [vmem:[%s163 + $0x20] sm:$0xff] %vm2262, %v2489
        %2498 = vst.msk [vmem:[%s163 + $0x28] sm:$0xff] %vm2262, %v2490
        %2499 = vst.msk [vmem:[%s163 + $0x30] sm:$0xff] %vm2262, %v2491
        %2500 = vst.msk [vmem:[%s163 + $0x38] sm:$0xff] %vm2262, %v2492
        %s2501 = sand.u32 %s93, 1
        %s2502 = scalar_lea.sflag [#allocation6], %s2501
        %s2503 = sand.u32 %s93, 1
        %s2504 = smul.addr %s2503, 64
        %s2505 = scalar_lea.vmem [#allocation5], %s2504
        // Predicated region
        $region33: #{tpu_custom_call.1} parent=31 // pred_check
          %p2506 = pneg %p103
        $region34: #{tpu_custom_call.1} parent=31 // pred_check_branch
          %2508 = sbr.rel (%p2506) target = $region36
        $region35: #{tpu_custom_call.1} parent=31 // pred_region
          %s2510 = ssub.s32 1024, 1024
          %2511 = vsyncadd %s2502, %s2510
          %s2512 = smul.addr %s17, 8
          %s2513 = smul.addr %s2512, 128
          %s2514 = scalar_lea.hbm %s3, %s2513
          %s2515 = sshll.u32 %s2505, 4
          %s2516 = int_to_ptr.vmem [resolvable:$true] %s2515
          %2521 = dma.vmem_to_hbm [thread:$0]  %s2516, 1024, %s2514, %s2502, 128, 128, 8
        $region36: #{tpu_custom_call.1} parent=31 // pred_fallthru
          _
      $region32: #{tpu_custom_call.1} parent=5 // pred_fallthru
        _
      %p2522 = scmp.le.s32.totalorder 2, %s12
      // Predicated region
      $region37: #{tpu_custom_call.1} parent=5 // pred_check
        %p2523 = pneg %p2522
      $region38: #{tpu_custom_call.1} parent=5 // pred_check_branch
        %2525 = sbr.rel (%p2523) target = $region40
      $region39: #{tpu_custom_call.1} parent=5 // pred_region
        %s2526 = ssub.s32 %s12, 2
        // Predicated region
        $region41: #{tpu_custom_call.1} parent=39 // pred_check
          %p2527 = pneg %p109
        $region42: #{tpu_custom_call.1} parent=39 // pred_check_branch
          %2529 = sbr.rel (%p2527) target = $region44
        $region43: #{tpu_custom_call.1} parent=39 // pred_region
          %s2530 = sand.u32 %s94, 1
          %s2531 = scalar_lea.sflag [#allocation6], %s2530
          %s2532 = sand.u32 %s94, 1
          %s2533 = smul.addr %s2532, 64
          %s2534 = scalar_lea.vmem [#allocation5], %s2533
          %2535 = dma.done %s2531, 1024
        $region44: #{tpu_custom_call.1} parent=39 // pred_fallthru
          _
      $region40: #{tpu_custom_call.1} parent=5 // pred_fallthru
        _
    $region6: #{tpu_custom_call.1} parent=1 // loop_footer
      %s16 = sadd.s32 1, %s12
    $region7: #{tpu_custom_call.1} parent=1 // loop_footer_branch
      %11 = sbr.rel target = $region3
    $region8: #{tpu_custom_call.1} parent=1 // loop_exit
      _
    %2536 = vsyncpa [#allocation6], 1
    %s2537 = scalar_lea.sflag [#allocation6], 1
    %2538 = vsyncpa %s2537, 1

</llo_original>
